<compile_context>
chip_gen: v5e
topology: v5e:2x2
jax: 0.10.0
libtpu: 0.0.40
codegen_flags: <defaults>
</compile_context>

<pallas_src>
import jax
import jax.numpy as jnp
from jax.experimental import pallas as pl
from jax.experimental.pallas import tpu as pltpu


def _pad8(n):
    return max(8, ((n + 7) // 8) * 8)


# ---------------------------------------------------------------------------
# Kernel
# ---------------------------------------------------------------------------
def _make_kernel(cin_p, h, t):
    """cin_p: channels padded to the 8-sublane tile; h: dim_hidden; t: per-
    sample time length (each lane block holds whole samples)."""

    def kernel(inv_gn_ref, x_ref, gx_ref, w_ref, b_ref, out_ref):
        nb = x_ref.shape[-1]                       # BB * T lanes in this block

        x = x_ref[...]                             # (cin_p, nb) f32
        gx = gx_ref[...] * inv_gn_ref[0, 0]        # grad_x / sqrt(mean(grad_x^2))

        # Edge masks hoisted once per distinct row count and reused by every
        # conv call (JAX does not CSE broadcast_in_dim / iota).
        col_c = jax.lax.broadcasted_iota(jnp.int32, (cin_p, nb), 1) % t
        col_h = jax.lax.broadcasted_iota(jnp.int32, (h, nb), 1) % t
        first_c, last_c = col_c == 0, col_c == t - 1
        first_h, last_h = col_h == 0, col_h == t - 1

        def shift(v, first, last):
            # prev[:, p] = v[:, p-1], nxt[:, p] = v[:, p+1]; zero at sample
            # boundaries.  Lane rolls run on the XLU, off the VALU path.
            prev = jnp.where(first, 0.0, pltpu.roll(v, shift=1, axis=1))
            nxt = jnp.where(last, 0.0, pltpu.roll(v, shift=nb - 1, axis=1))
            return prev, nxt

        def matmul(w, rhs_f32, b):
            # bf16 MXU inputs, f32 accumulation.
            return jnp.dot(w, rhs_f32.astype(jnp.bfloat16),
                           preferred_element_type=jnp.float32) + b

        # ---- stage 1: encoder(x) (+) encoder_grad(grad_x), block-diag fused
        px, nx = shift(x, first_c, last_c)
        pg, ng = shift(gx, first_c, last_c)
        rhs1 = jnp.concatenate([px, x, nx, pg, gx, ng], axis=0)   # (6*cin_p, nb)
        enc = matmul(w_ref[0:2 * h, 0:6 * cin_p], rhs1, b_ref[0:2 * h, :])
        enc_x, enc_g = enc[0:h, :], enc[h:2 * h, :]               # (h, nb) each

        # ---- stage 2: moment (+) 2nd-moment LSTM gates, block-diag fused ---
        # LSTM state is zero: hidden input-half and remember-gate rows were
        # removed in the wrapper; squares of the shifted tensors serve the
        # grad_x**2 branch (no extra rolls).
        pe, ne = shift(enc_g, first_h, last_h)
        rhs2 = jnp.concatenate([pe, enc_g, ne,
                                pe * pe, enc_g * enc_g, ne * ne], axis=0)  # (6h, nb)
        g = matmul(w_ref[2 * h:8 * h, 0:6 * h], rhs2, b_ref[2 * h:8 * h, :])

        def lstm_zero_state(in_g, out_g, cell_g):
            cell = jax.nn.sigmoid(in_g) * jnp.tanh(cell_g)   # remember*cell == 0
            return jax.nn.sigmoid(out_g) * jnp.tanh(cell)

        moment = lstm_zero_state(g[0:h], g[h:2 * h], g[2 * h:3 * h])
        hidden2 = lstm_zero_state(g[3 * h:4 * h], g[4 * h:5 * h], g[5 * h:6 * h])
        # moment / sqrt(sigmoid(hidden2)) == moment * sqrt(1 + exp(-hidden2))
        gxn = moment * jnp.sqrt(1.0 + jnp.exp(-hidden2))          # (h, nb)

        # ---- stage 3: decoder(enc_x) (+) decoder_grad(gxn), out = lr * o ---
        pex, nex = shift(enc_x, first_h, last_h)
        pgn, ngn = shift(gxn, first_h, last_h)
        rhs3 = jnp.concatenate([pex, enc_x, nex, pgn, gxn, ngn], axis=0)   # (6h, nb)
        row0 = 8 * h
        dd = matmul(w_ref[row0:row0 + 2 * cin_p, 0:6 * h], rhs3,
                    b_ref[row0:row0 + 2 * cin_p, :])              # (2*cin_p, nb)
        out_ref[...] = dd[0:cin_p, :] * dd[cin_p:2 * cin_p, :]

    return kernel


# ---------------------------------------------------------------------------
# Parameter preparation (PyTorch Conv2d layout -> packed kernel slabs)
# ---------------------------------------------------------------------------
def _mid_taps(w4d):
    """Conv2d weight (Cout, Cin, kh, kw) -> (Cout, Cin, kh): with a (T,1)
    'image' and pad=k//2, only the middle kw column ever touches real data."""
    k = w4d.shape[-1]
    return w4d[:, :, :, k // 2]


def _flatten_taps(w3):
    # (Cout, Cin, 3) -> (Cout, 3*Cin) with K blocks ordered [t-1 | t | t+1].
    return jnp.concatenate([w3[:, :, 0], w3[:, :, 1], w3[:, :, 2]], axis=1)


def _block_diag(a, b):
    m1, k1 = a.shape
    m2, k2 = b.shape
    top = jnp.concatenate([a, jnp.zeros((m1, k2), a.dtype)], axis=1)
    bot = jnp.concatenate([jnp.zeros((m2, k1), b.dtype), b], axis=1)
    return jnp.concatenate([top, bot], axis=0)


def pack_params(params, dim_in, dim_hidden):
    """Fold the 6 live Conv2d layers into one bf16 weight slab + one f32 bias
    slab, pre-padded / block-diagonalised so the kernel only takes aligned
    static slices.  Row layout: [enc+encg | gm+g2m | dec+decg]."""
    h = dim_hidden
    cin_p = _pad8(dim_in)

    def enc_w(w4d):                                   # (H, Cin, 3, 3) -> (H, 3*cin_p)
        w3 = _mid_taps(w4d)
        w3 = jnp.pad(w3, ((0, 0), (0, cin_p - w3.shape[1]), (0, 0)))
        return _flatten_taps(w3)

    def dec_wb(w4d, b):                               # (Cin, H, 3, 3) -> (cin_p, 3H)
        w = _flatten_taps(_mid_taps(w4d))
        return (jnp.pad(w, ((0, cin_p - w.shape[0]), (0, 0))),
                jnp.pad(b, (0, cin_p - b.shape[0])))

    def gate_wb(w4d, b):                              # (4H, 2H, 3, 3) -> (3H, 3H)
        w3 = _mid_taps(w4d)[:, :h, :]                 # hidden-state half: state == 0
        keep = jnp.concatenate([w3[0:h], w3[2 * h:3 * h], w3[3 * h:4 * h]],
                               axis=0)                # rows: [in | out | cell]
        bk = jnp.concatenate([b[0:h], b[2 * h:3 * h], b[3 * h:4 * h]])
        return _flatten_taps(keep), bk

    w_enc = enc_w(params["enc"][0])
    w_eng = enc_w(params["encg"][0])
    w_dec, b_dec = dec_wb(*params["dec"])
    w_dcg, b_dcg = dec_wb(*params["decg"])
    w_gm, b_gm = gate_wb(*params["gm"])
    w_g2, b_g2 = gate_wb(*params["g2m"])

    # Block-diag fusion: enc+encg, gm+g2m, dec+decg each become ONE matmul.
    w_ee = _block_diag(w_enc, w_eng)                  # (2H, 6*cin_p)
    w_gg = _block_diag(w_gm, w_g2)                    # (6H, 6H)
    w_dd = _block_diag(w_dec, w_dcg)                  # (2*cin_p, 6H)

    kmax = max(w_ee.shape[1], w_gg.shape[1], w_dd.shape[1])

    def padk(w):
        return jnp.pad(w, ((0, 0), (0, kmax - w.shape[1])))

    w_slab = jnp.concatenate([padk(w_ee), padk(w_gg), padk(w_dd)],
                             axis=0).astype(jnp.bfloat16)
    b_slab = jnp.concatenate([params["enc"][1], params["encg"][1],
                              b_gm, b_g2, b_dec, b_dcg]).reshape(-1, 1)
    return w_slab, b_slab.astype(jnp.float32)


def _rand_conv(key, cin, cout, k=3):
    """Deterministic stand-in for torch Conv2d(cin->cout, k, pad=k//2) params."""
    wk, bk = jax.random.split(key)
    w = jax.random.normal(wk, (cout, cin, k, k), jnp.float32)
    w = w * (1.0 / (cin * k * k)) ** 0.5
    b = jax.random.normal(bk, (cout,), jnp.float32) * 0.01
    return w, b


def init_params(key, dim_in, dim_hidden, k=3):
    keys = jax.random.split(key, 6)
    h = dim_hidden
    return {
        "enc": _rand_conv(keys[0], dim_in, h, k),
        "encg": _rand_conv(keys[1], dim_in, h, k),
        "dec": _rand_conv(keys[2], h, dim_in, k),
        "decg": _rand_conv(keys[3], h, dim_in, k),
        # gates_lr (3H -> 4H) exists in the module but its output is dead
        # (immediately overwritten in forward), so it is not materialised.
        "gm": _rand_conv(keys[4], 2 * h, 4 * h, k),
        "g2m": _rand_conv(keys[5], 2 * h, 4 * h, k),
    }


# ---------------------------------------------------------------------------
# Forward wrapper
# ---------------------------------------------------------------------------
def rearranged_conv_lstm_grad_forward(x_bct, grad_bct, gradients,
                                      w_slab, b_slab, dim_in, dim_hidden):
    """x, grad_x, gradients: (B, C, T) — PyTorch 'b c t' layout."""
    x = x_bct.astype(jnp.float32)
    g = grad_bct.astype(jnp.float32)
    B, cin, T = x.shape
    assert cin == dim_in
    cin_p = _pad8(cin)
    h = dim_hidden

    # Global grad-norm hoisted out of the gridded kernel so batch blocks stay
    # independent.  NOTE: faithful to the reference — no epsilon is added.
    inv_gn = jax.lax.rsqrt(jnp.mean(g * g)).reshape(1, 1)

    # Fold batch into the lane axis: (B, C, T) -> (cin_p, B*T) so each kernel
    # block is lane-dense and matmul N becomes BB*T.
    def to_2d(a):
        a = jnp.pad(a, ((0, 0), (0, cin_p - cin), (0, 0)))
        return jnp.transpose(a, (1, 0, 2)).reshape(cin_p, B * T)

    x2, g2 = to_2d(x), to_2d(g)

    # Batch-blocking: amortise per-grid-step overhead over BB samples, keep
    # >= 2 grid steps so both v7x TensorCores get work, and fall back to one
    # full-width block if BB*T is not a multiple of 128 lanes.
    bb = max(1, min(B, max(1, 2048 // T)))
    if B >= 2:
        bb = min(bb, max(1, B // 2))
    while B % bb:
        bb -= 1
    if (bb * T) % 128 != 0:
        bb = B
    nb = bb * T
    grid = (B // bb,)

    out2 = pl.pallas_call(
        _make_kernel(cin_p, h, T),
        out_shape=jax.ShapeDtypeStruct((cin_p, B * T), jnp.float32),
        grid=grid,
        in_specs=[
            pl.BlockSpec(memory_space=pltpu.MemorySpace.SMEM),   # 1/grad_norm
            pl.BlockSpec((cin_p, nb), lambda i: (0, i)),         # x
            pl.BlockSpec((cin_p, nb), lambda i: (0, i)),         # grad_x
            pl.BlockSpec(w_slab.shape, lambda i: (0, 0)),        # weight slab (bf16)
            pl.BlockSpec(b_slab.shape, lambda i: (0, 0)),        # bias slab (f32)
        ],
        out_specs=pl.BlockSpec((cin_p, nb), lambda i: (0, i)),
        compiler_params=pltpu.CompilerParams(
            dimension_semantics=("parallel",),       # batch blocks independent
            vmem_limit_bytes=32 * 1024 * 1024,       # safe on v7x's 64 MiB too
        ),
    )(inv_gn, x2, g2, w_slab, b_slab)

    out = out2.reshape(cin_p, B, T).transpose(1, 0, 2)[:, :cin, :]
    return out, gradients


# ---------------------------------------------------------------------------
# Pure-XLA reference (near-literal PyTorch forward) for the numerical check
# ---------------------------------------------------------------------------
def reference_forward(x, grad_x, params, dim_hidden):
    def conv(v, w, b):
        y = jax.lax.conv_general_dilated(
            v, w, window_strides=(1, 1), padding=((1, 1), (1, 1)),
            dimension_numbers=("NCHW", "OIHW", "NCHW"))
        return y + b.reshape(1, -1, 1, 1)

    def lstm(inp, w, b, h):
        B, _, T, _ = inp.shape
        hidden = jnp.zeros((B, h, T, 1), jnp.float32)
        cell = jnp.zeros((B, h, T, 1), jnp.float32)
        gates = conv(jnp.concatenate([inp, hidden], axis=1), w, b)
        i, r, o, c = jnp.split(gates, 4, axis=1)
        i, r, o = map(jax.nn.sigmoid, (i, r, o))
        cell = r * cell + i * jnp.tanh(c)
        return o * jnp.tanh(cell)

    h = dim_hidden
    x4 = x[..., None].astype(jnp.float32)
    g4 = grad_x[..., None].astype(jnp.float32)
    g4 = g4 / jnp.sqrt(jnp.mean(g4 ** 2))
    ex = conv(x4, *params["enc"])
    eg = conv(g4, *params["encg"])
    moment = lstm(eg, *params["gm"], h)
    second = jax.nn.sigmoid(lstm(eg ** 2, *params["g2m"], h))
    gn = moment / jnp.sqrt(second)
    lr = conv(ex, *params["dec"])
    o = conv(gn, *params["decg"])
    return (lr * o)[..., 0]


if __name__ == "__main__":
    # Small, lane-native shapes: batch=2, channels(dim_in)=4, T=128, hidden=32.
    B, C_IN, T, DIM_HIDDEN = 2, 4, 128, 32

    key = jax.random.PRNGKey(0)
    k_x, k_g, k_gr, k_p = jax.random.split(key, 4)
    x = jax.random.normal(k_x, (B, C_IN, T), jnp.float32)
    grad_x = jax.random.normal(k_g, (B, C_IN, T), jnp.float32)
    gradients = jax.random.normal(k_gr, (B, C_IN, T), jnp.float32)

    params = init_params(k_p, C_IN, DIM_HIDDEN)
    w_slab, b_slab = pack_params(params, C_IN, DIM_HIDDEN)

    fwd = jax.jit(rearranged_conv_lstm_grad_forward, static_argnums=(5, 6))
    out, grads_out = fwd(x, grad_x, gradients, w_slab, b_slab, C_IN, DIM_HIDDEN)
    jax.block_until_ready(out)
    jax.block_until_ready(grads_out)

    assert out.shape == (B, C_IN, T) and out.dtype == jnp.float32
    assert bool(jnp.all(jnp.isfinite(out)))

    # Numerical check against the plain-XLA translation of the PyTorch forward
    # (bf16 MXU inputs in the kernel -> modest tolerance).
    ref = reference_forward(x, grad_x, params, DIM_HIDDEN)
    err = float(jnp.max(jnp.abs(out - ref)) / (jnp.max(jnp.abs(ref)) + 1e-6))
    assert err < 5e-2, f"max relative error {err}"

    print("KERNEL_OK")
</pallas_src>

<mosaic_0001>
module attributes {stable_mosaic.version = 11 : i64} {
  func.func @kernel(%arg0: i32, %arg1: memref<1x1xf32, #tpu.memory_space<smem>>, %arg2: memref<8x128xf32, #tpu.memory_space<vmem>>, %arg3: memref<8x128xf32, #tpu.memory_space<vmem>>, %arg4: memref<272x192xbf16, #tpu.memory_space<vmem>>, %arg5: memref<272x1xf32, #tpu.memory_space<vmem>>, %arg6: memref<8x128xf32, #tpu.memory_space<vmem>>) attributes {dimension_semantics = [#tpu.dimension_semantics<parallel>], iteration_bounds = array<i64: 2>, scalar_prefetch = 0 : i64, scratch_operands = 0 : i64, tpu.core_type = #tpu.core_type<tc>, window_params = [{transform_indices = @transform_0, window_bounds = array<i64: 1, 1>}, {transform_indices = @transform_1, window_bounds = array<i64: 8, 128>}, {transform_indices = @transform_2, window_bounds = array<i64: 8, 128>}, {pipeline_mode = #tpu.pipeline_mode<synchronous>, transform_indices = @transform_3, window_bounds = array<i64: 272, 192>}, {pipeline_mode = #tpu.pipeline_mode<synchronous>, transform_indices = @transform_4, window_bounds = array<i64: 272, 1>}, {transform_indices = @transform_5, window_bounds = array<i64: 8, 128>}]} {
    %c0 = arith.constant 0 : index
    %c0_0 = arith.constant 0 : index
    %0 = vector.load %arg2[%c0, %c0_0] : memref<8x128xf32, #tpu.memory_space<vmem>>, vector<8x128xf32>
    %c0_1 = arith.constant 0 : index
    %c0_2 = arith.constant 0 : index
    %1 = vector.load %arg3[%c0_1, %c0_2] : memref<8x128xf32, #tpu.memory_space<vmem>>, vector<8x128xf32>
    %c0_3 = arith.constant 0 : index
    %c0_4 = arith.constant 0 : index
    %2 = memref.load %arg1[%c0_3, %c0_4] : memref<1x1xf32, #tpu.memory_space<smem>>
    %3 = vector.broadcast %2 : f32 to vector<8x128xf32>
    %4 = arith.mulf %1, %3 : vector<8x128xf32>
    %5 = tpu.iota {dimensions = array<i32: 1>} : vector<8x128xi32>
    %c128_i32 = arith.constant 128 : i32
    %c0_i32 = arith.constant 0 : i32
    %6 = arith.cmpi eq, %c128_i32, %c0_i32 : i32
    %c1_i32 = arith.constant 1 : i32
    %7 = arith.select %6, %c1_i32, %c128_i32 : i32
    %8 = vector.broadcast %7 : i32 to vector<8x128xi32>
    %9 = arith.remsi %5, %8 : vector<8x128xi32>
    %c0_i32_5 = arith.constant 0 : i32
    %10 = vector.broadcast %c0_i32_5 : i32 to vector<8x128xi32>
    %11 = arith.cmpi ne, %9, %10 : vector<8x128xi32>
    %c0_i32_6 = arith.constant 0 : i32
    %12 = vector.broadcast %c0_i32_6 : i32 to vector<8x128xi32>
    %13 = arith.cmpi slt, %9, %12 : vector<8x128xi32>
    %c0_i32_7 = arith.constant 0 : i32
    %14 = arith.cmpi slt, %7, %c0_i32_7 : i32
    %15 = vector.broadcast %14 : i1 to vector<8x128xi1>
    %16 = vector.broadcast %15 : vector<8x128xi1> to vector<8x128xi1>
    %17 = arith.xori %13, %16 : vector<8x128xi1>
    %18 = arith.andi %17, %11 : vector<8x128xi1>
    %19 = vector.broadcast %7 : i32 to vector<8x128xi32>
    %20 = arith.addi %9, %19 : vector<8x128xi32>
    %21 = arith.select %18, %20, %9 : vector<8x128xi1>, vector<8x128xi32>
    %22 = tpu.iota {dimensions = array<i32: 1>} : vector<32x128xi32>
    %c128_i32_8 = arith.constant 128 : i32
    %c0_i32_9 = arith.constant 0 : i32
    %23 = arith.cmpi eq, %c128_i32_8, %c0_i32_9 : i32
    %c1_i32_10 = arith.constant 1 : i32
    %24 = arith.select %23, %c1_i32_10, %c128_i32_8 : i32
    %25 = vector.broadcast %24 : i32 to vector<32x128xi32>
    %26 = arith.remsi %22, %25 : vector<32x128xi32>
    %c0_i32_11 = arith.constant 0 : i32
    %27 = vector.broadcast %c0_i32_11 : i32 to vector<32x128xi32>
    %28 = arith.cmpi ne, %26, %27 : vector<32x128xi32>
    %c0_i32_12 = arith.constant 0 : i32
    %29 = vector.broadcast %c0_i32_12 : i32 to vector<32x128xi32>
    %30 = arith.cmpi slt, %26, %29 : vector<32x128xi32>
    %c0_i32_13 = arith.constant 0 : i32
    %31 = arith.cmpi slt, %24, %c0_i32_13 : i32
    %32 = vector.broadcast %31 : i1 to vector<32x128xi1>
    %33 = vector.broadcast %32 : vector<32x128xi1> to vector<32x128xi1>
    %34 = arith.xori %30, %33 : vector<32x128xi1>
    %35 = arith.andi %34, %28 : vector<32x128xi1>
    %36 = vector.broadcast %24 : i32 to vector<32x128xi32>
    %37 = arith.addi %26, %36 : vector<32x128xi32>
    %38 = arith.select %35, %37, %26 : vector<32x128xi1>, vector<32x128xi32>
    %c0_i32_14 = arith.constant 0 : i32
    %39 = vector.broadcast %c0_i32_14 : i32 to vector<8x128xi32>
    %40 = arith.cmpi eq, %21, %39 : vector<8x128xi32>
    %c127_i32 = arith.constant 127 : i32
    %41 = vector.broadcast %c127_i32 : i32 to vector<8x128xi32>
    %42 = arith.cmpi eq, %21, %41 : vector<8x128xi32>
    %c0_i32_15 = arith.constant 0 : i32
    %43 = vector.broadcast %c0_i32_15 : i32 to vector<32x128xi32>
    %44 = arith.cmpi eq, %38, %43 : vector<32x128xi32>
    %c127_i32_16 = arith.constant 127 : i32
    %45 = vector.broadcast %c127_i32_16 : i32 to vector<32x128xi32>
    %46 = arith.cmpi eq, %38, %45 : vector<32x128xi32>
    %c1_i32_17 = arith.constant 1 : i32
    %47 = tpu.dynamic_rotate %0 by %c1_i32_17 dim 1 : vector<8x128xf32>, i32 -> vector<8x128xf32>
    %cst = arith.constant 0.000000e+00 : f32
    %48 = vector.broadcast %cst : f32 to vector<8x128xf32>
    %49 = arith.select %40, %48, %47 : vector<8x128xi1>, vector<8x128xf32>
    %c127_i32_18 = arith.constant 127 : i32
    %50 = tpu.dynamic_rotate %0 by %c127_i32_18 dim 1 : vector<8x128xf32>, i32 -> vector<8x128xf32>
    %cst_19 = arith.constant 0.000000e+00 : f32
    %51 = vector.broadcast %cst_19 : f32 to vector<8x128xf32>
    %52 = arith.select %42, %51, %50 : vector<8x128xi1>, vector<8x128xf32>
    %c1_i32_20 = arith.constant 1 : i32
    %53 = tpu.dynamic_rotate %4 by %c1_i32_20 dim 1 : vector<8x128xf32>, i32 -> vector<8x128xf32>
    %cst_21 = arith.constant 0.000000e+00 : f32
    %54 = vector.broadcast %cst_21 : f32 to vector<8x128xf32>
    %55 = arith.select %40, %54, %53 : vector<8x128xi1>, vector<8x128xf32>
    %c127_i32_22 = arith.constant 127 : i32
    %56 = tpu.dynamic_rotate %4 by %c127_i32_22 dim 1 : vector<8x128xf32>, i32 -> vector<8x128xf32>
    %cst_23 = arith.constant 0.000000e+00 : f32
    %57 = vector.broadcast %cst_23 : f32 to vector<8x128xf32>
    %58 = arith.select %42, %57, %56 : vector<8x128xi1>, vector<8x128xf32>
    %59 = tpu.concatenate %49, %0, %52, %55, %4, %58 in 0 : vector<8x128xf32>, vector<8x128xf32>, vector<8x128xf32>, vector<8x128xf32>, vector<8x128xf32>, vector<8x128xf32> -> vector<48x128xf32>
    %c0_24 = arith.constant 0 : index
    %c0_25 = arith.constant 0 : index
    %60 = vector.load %arg4[%c0_24, %c0_25] : memref<272x192xbf16, #tpu.memory_space<vmem>>, vector<64x48xbf16>
    %c0_26 = arith.constant 0 : index
    %c0_27 = arith.constant 0 : index
    %61 = vector.load %arg5[%c0_26, %c0_27] : memref<272x1xf32, #tpu.memory_space<vmem>>, vector<64x1xf32>
    %62 = arith.truncf %59 : vector<48x128xf32> to vector<48x128xbf16>
    %cst_28 = arith.constant dense<0.000000e+00> : vector<64x128xf32>
    %63 = tpu.matmul %60, %62, %cst_28 {dimension_numbers = #tpu.dot_dimension_numbers<[1], [0], [0], [1], [0, 0, 1, 1], [], []>} : vector<64x48xbf16>, vector<48x128xbf16>, vector<64x128xf32> -> vector<64x128xf32>
    %64 = vector.broadcast %61 : vector<64x1xf32> to vector<64x128xf32>
    %65 = arith.addf %63, %64 : vector<64x128xf32>
    %66 = vector.extract_strided_slice %65 {offsets = [0, 0], sizes = [32, 128], strides = [1, 1]} : vector<64x128xf32> to vector<32x128xf32>
    %67 = vector.extract_strided_slice %65 {offsets = [32, 0], sizes = [32, 128], strides = [1, 1]} : vector<64x128xf32> to vector<32x128xf32>
    %c1_i32_29 = arith.constant 1 : i32
    %68 = tpu.dynamic_rotate %67 by %c1_i32_29 dim 1 : vector<32x128xf32>, i32 -> vector<32x128xf32>
    %cst_30 = arith.constant 0.000000e+00 : f32
    %69 = vector.broadcast %cst_30 : f32 to vector<32x128xf32>
    %70 = arith.select %44, %69, %68 : vector<32x128xi1>, vector<32x128xf32>
    %c127_i32_31 = arith.constant 127 : i32
    %71 = tpu.dynamic_rotate %67 by %c127_i32_31 dim 1 : vector<32x128xf32>, i32 -> vector<32x128xf32>
    %cst_32 = arith.constant 0.000000e+00 : f32
    %72 = vector.broadcast %cst_32 : f32 to vector<32x128xf32>
    %73 = arith.select %46, %72, %71 : vector<32x128xi1>, vector<32x128xf32>
    %74 = arith.mulf %70, %70 : vector<32x128xf32>
    %75 = arith.mulf %67, %67 : vector<32x128xf32>
    %76 = arith.mulf %73, %73 : vector<32x128xf32>
    %77 = tpu.concatenate %70, %67, %73, %74, %75, %76 in 0 : vector<32x128xf32>, vector<32x128xf32>, vector<32x128xf32>, vector<32x128xf32>, vector<32x128xf32>, vector<32x128xf32> -> vector<192x128xf32>
    %c64 = arith.constant 64 : index
    %c0_33 = arith.constant 0 : index
    %78 = vector.load %arg4[%c64, %c0_33] : memref<272x192xbf16, #tpu.memory_space<vmem>>, vector<192x192xbf16>
    %c64_34 = arith.constant 64 : index
    %c0_35 = arith.constant 0 : index
    %79 = vector.load %arg5[%c64_34, %c0_35] : memref<272x1xf32, #tpu.memory_space<vmem>>, vector<192x1xf32>
    %80 = arith.truncf %77 : vector<192x128xf32> to vector<192x128xbf16>
    %cst_36 = arith.constant dense<0.000000e+00> : vector<192x128xf32>
    %81 = tpu.matmul %78, %80, %cst_36 {dimension_numbers = #tpu.dot_dimension_numbers<[1], [0], [0], [1], [0, 0, 1, 1], [], []>} : vector<192x192xbf16>, vector<192x128xbf16>, vector<192x128xf32> -> vector<192x128xf32>
    %82 = vector.broadcast %79 : vector<192x1xf32> to vector<192x128xf32>
    %83 = arith.addf %81, %82 : vector<192x128xf32>
    %84 = vector.extract_strided_slice %83 {offsets = [0, 0], sizes = [32, 128], strides = [1, 1]} : vector<192x128xf32> to vector<32x128xf32>
    %85 = vector.extract_strided_slice %83 {offsets = [32, 0], sizes = [32, 128], strides = [1, 1]} : vector<192x128xf32> to vector<32x128xf32>
    %86 = vector.extract_strided_slice %83 {offsets = [64, 0], sizes = [32, 128], strides = [1, 1]} : vector<192x128xf32> to vector<32x128xf32>
    %87 = arith.negf %84 : vector<32x128xf32>
    %88 = math.exp %87 : vector<32x128xf32>
    %cst_37 = arith.constant 1.000000e+00 : f32
    %89 = vector.broadcast %cst_37 : f32 to vector<32x128xf32>
    %90 = arith.addf %89, %88 : vector<32x128xf32>
    %91 = arith.divf %89, %90 : vector<32x128xf32>
    %92 = math.tanh %86 : vector<32x128xf32>
    %93 = arith.mulf %91, %92 : vector<32x128xf32>
    %94 = arith.negf %85 : vector<32x128xf32>
    %95 = math.exp %94 : vector<32x128xf32>
    %cst_38 = arith.constant 1.000000e+00 : f32
    %96 = vector.broadcast %cst_38 : f32 to vector<32x128xf32>
    %97 = arith.addf %96, %95 : vector<32x128xf32>
    %98 = arith.divf %96, %97 : vector<32x128xf32>
    %99 = math.tanh %93 : vector<32x128xf32>
    %100 = arith.mulf %98, %99 : vector<32x128xf32>
    %101 = vector.extract_strided_slice %83 {offsets = [96, 0], sizes = [32, 128], strides = [1, 1]} : vector<192x128xf32> to vector<32x128xf32>
    %102 = vector.extract_strided_slice %83 {offsets = [128, 0], sizes = [32, 128], strides = [1, 1]} : vector<192x128xf32> to vector<32x128xf32>
    %103 = vector.extract_strided_slice %83 {offsets = [160, 0], sizes = [32, 128], strides = [1, 1]} : vector<192x128xf32> to vector<32x128xf32>
    %104 = arith.negf %101 : vector<32x128xf32>
    %105 = math.exp %104 : vector<32x128xf32>
    %cst_39 = arith.constant 1.000000e+00 : f32
    %106 = vector.broadcast %cst_39 : f32 to vector<32x128xf32>
    %107 = arith.addf %106, %105 : vector<32x128xf32>
    %108 = arith.divf %106, %107 : vector<32x128xf32>
    %109 = math.tanh %103 : vector<32x128xf32>
    %110 = arith.mulf %108, %109 : vector<32x128xf32>
    %111 = arith.negf %102 : vector<32x128xf32>
    %112 = math.exp %111 : vector<32x128xf32>
    %cst_40 = arith.constant 1.000000e+00 : f32
    %113 = vector.broadcast %cst_40 : f32 to vector<32x128xf32>
    %114 = arith.addf %113, %112 : vector<32x128xf32>
    %115 = arith.divf %113, %114 : vector<32x128xf32>
    %116 = math.tanh %110 : vector<32x128xf32>
    %117 = arith.mulf %115, %116 : vector<32x128xf32>
    %cst_41 = arith.constant 0.000000e+00 : f32
    %118 = vector.broadcast %cst_41 : f32 to vector<32x128xf32>
    %119 = arith.subf %118, %117 : vector<32x128xf32>
    %120 = math.exp %119 : vector<32x128xf32>
    %cst_42 = arith.constant 1.000000e+00 : f32
    %121 = vector.broadcast %cst_42 : f32 to vector<32x128xf32>
    %122 = arith.addf %121, %120 : vector<32x128xf32>
    %123 = math.sqrt %122 : vector<32x128xf32>
    %124 = arith.mulf %100, %123 : vector<32x128xf32>
    %c1_i32_43 = arith.constant 1 : i32
    %125 = tpu.dynamic_rotate %66 by %c1_i32_43 dim 1 : vector<32x128xf32>, i32 -> vector<32x128xf32>
    %cst_44 = arith.constant 0.000000e+00 : f32
    %126 = vector.broadcast %cst_44 : f32 to vector<32x128xf32>
    %127 = arith.select %44, %126, %125 : vector<32x128xi1>, vector<32x128xf32>
    %c127_i32_45 = arith.constant 127 : i32
    %128 = tpu.dynamic_rotate %66 by %c127_i32_45 dim 1 : vector<32x128xf32>, i32 -> vector<32x128xf32>
    %cst_46 = arith.constant 0.000000e+00 : f32
    %129 = vector.broadcast %cst_46 : f32 to vector<32x128xf32>
    %130 = arith.select %46, %129, %128 : vector<32x128xi1>, vector<32x128xf32>
    %c1_i32_47 = arith.constant 1 : i32
    %131 = tpu.dynamic_rotate %124 by %c1_i32_47 dim 1 : vector<32x128xf32>, i32 -> vector<32x128xf32>
    %cst_48 = arith.constant 0.000000e+00 : f32
    %132 = vector.broadcast %cst_48 : f32 to vector<32x128xf32>
    %133 = arith.select %44, %132, %131 : vector<32x128xi1>, vector<32x128xf32>
    %c127_i32_49 = arith.constant 127 : i32
    %134 = tpu.dynamic_rotate %124 by %c127_i32_49 dim 1 : vector<32x128xf32>, i32 -> vector<32x128xf32>
    %cst_50 = arith.constant 0.000000e+00 : f32
    %135 = vector.broadcast %cst_50 : f32 to vector<32x128xf32>
    %136 = arith.select %46, %135, %134 : vector<32x128xi1>, vector<32x128xf32>
    %137 = tpu.concatenate %127, %66, %130, %133, %124, %136 in 0 : vector<32x128xf32>, vector<32x128xf32>, vector<32x128xf32>, vector<32x128xf32>, vector<32x128xf32>, vector<32x128xf32> -> vector<192x128xf32>
    %c256 = arith.constant 256 : index
    %c0_51 = arith.constant 0 : index
    %138 = vector.load %arg4[%c256, %c0_51] : memref<272x192xbf16, #tpu.memory_space<vmem>>, vector<16x192xbf16>
    %c256_52 = arith.constant 256 : index
    %c0_53 = arith.constant 0 : index
    %139 = vector.load %arg5[%c256_52, %c0_53] : memref<272x1xf32, #tpu.memory_space<vmem>>, vector<16x1xf32>
    %140 = arith.truncf %137 : vector<192x128xf32> to vector<192x128xbf16>
    %cst_54 = arith.constant dense<0.000000e+00> : vector<16x128xf32>
    %141 = tpu.matmul %138, %140, %cst_54 {dimension_numbers = #tpu.dot_dimension_numbers<[1], [0], [0], [1], [0, 0, 1, 1], [], []>} : vector<16x192xbf16>, vector<192x128xbf16>, vector<16x128xf32> -> vector<16x128xf32>
    %142 = vector.broadcast %139 : vector<16x1xf32> to vector<16x128xf32>
    %143 = arith.addf %141, %142 : vector<16x128xf32>
    %144 = vector.extract_strided_slice %143 {offsets = [0, 0], sizes = [8, 128], strides = [1, 1]} : vector<16x128xf32> to vector<8x128xf32>
    %145 = vector.extract_strided_slice %143 {offsets = [8, 0], sizes = [8, 128], strides = [1, 1]} : vector<16x128xf32> to vector<8x128xf32>
    %146 = arith.mulf %144, %145 : vector<8x128xf32>
    %c0_55 = arith.constant 0 : index
    %c0_56 = arith.constant 0 : index
    %147 = vector.load %arg6[%c0_55, %c0_56] : memref<8x128xf32, #tpu.memory_space<vmem>>, vector<8x128xf32>
    tpu.vector_store %arg6[%c0_55, %c0_56], %146 {strides = array<i32>} : memref<8x128xf32, #tpu.memory_space<vmem>>, vector<8x128xf32>,
    return
  }
  func.func @transform_0(%arg0: i32) -> (i32, i32) {
    %c0_i32 = arith.constant 0 : i32
    %c0_i32_0 = arith.constant 0 : i32
    %c0_i32_1 = arith.constant 0 : i32
    return %c0_i32, %c0_i32_0 : i32, i32
  }
  func.func @transform_1(%arg0: i32) -> (i32, i32) {
    %c0_i32 = arith.constant 0 : i32
    %c0_i32_0 = arith.constant 0 : i32
    return %c0_i32, %arg0 : i32, i32
  }
  func.func @transform_2(%arg0: i32) -> (i32, i32) {
    %c0_i32 = arith.constant 0 : i32
    %c0_i32_0 = arith.constant 0 : i32
    return %c0_i32, %arg0 : i32, i32
  }
  func.func @transform_3(%arg0: i32) -> (i32, i32) {
    %c0_i32 = arith.constant 0 : i32
    %c0_i32_0 = arith.constant 0 : i32
    %c0_i32_1 = arith.constant 0 : i32
    return %c0_i32, %c0_i32_0 : i32, i32
  }
  func.func @transform_4(%arg0: i32) -> (i32, i32) {
    %c0_i32 = arith.constant 0 : i32
    %c0_i32_0 = arith.constant 0 : i32
    %c0_i32_1 = arith.constant 0 : i32
    return %c0_i32, %c0_i32_0 : i32, i32
  }
  func.func @transform_5(%arg0: i32) -> (i32, i32) {
    %c0_i32 = arith.constant 0 : i32
    %c0_i32_0 = arith.constant 0 : i32
    return %c0_i32, %arg0 : i32, i32
  }
}

</mosaic_0001>

<llo_original>
// kernel: rearranged_conv_lstm_grad_forward.1
$region0: #{rearranged_conv_lstm_grad_forward.1}
  #allocation0 [shape = 'u32[]', space=smem, size = 0x4, offset = 0x4, fixed_abs, tag = 'smem constant byte address 0x4 - core index']
  #allocation1 [shape = 'u32[72,128]{1,0:T(1,128)}', space=vmem, size = 0x9000, scoped, tag = 'internal scratch']
  #allocation2 [shape = 'f32[1,1]{1,0:T(1,128)S(6)}', space=smem, size = 0x200, scoped, tag = 'scoped memory for rearranged_conv_lstm_grad_forward.1']
  %s0 = inlined_call_operand.<no memory space> [shape: f32[1,1], index: 0, kind: input, shape index: {}]
  %s1 = inlined_call_operand.vmem [shape: f32[8,256], index: 1, kind: input, shape index: {}]
  %s2 = inlined_call_operand.vmem [shape: f32[8,256], index: 2, kind: input, shape index: {}]
  %s3 = inlined_call_operand.vmem [shape: bf16[272,192], index: 3, kind: input, shape index: {}]
  %s4 = inlined_call_operand.vmem [shape: f32[272,1], index: 4, kind: input, shape index: {}]
  %s5 = inlined_call_operand.vmem [shape: f32[8,256], index: 5, kind: output, shape index: {}]
  %s6 = sld [smem:[#allocation0]]
  $region53: #{rearranged_conv_lstm_grad_forward.1} parent=0
    _
  %s8 = ssub.s32 1, %s6
  %s9 = scalar_select 0, %s8, %s6
  %10 = sst [smem:[#allocation2]] %s0
  loop: start=0, step=1, limit=4
  $region2: #{rearranged_conv_lstm_grad_forward.1} parent=0 // loop_pre_header
    _
  $region3: #{rearranged_conv_lstm_grad_forward.1} parent=0 // loop_header
    %s12 = sphi 0, %s16
    %p13 = scmp.ge.s32.totalorder %s12, 4
    %s20 = sphi 0, %s20
    %s22 = sphi 0, %s20
    %s23 = sphi 0, %s22
    %s37 = sphi 0, %s23
    %s43 = sphi 0, %s45
    %s46 = sphi 0, %s43
    %s47 = sphi 0, %s46
    %s63 = sphi 0, %s47
    %s69 = sphi 0, %s71
    %s72 = sphi 0, %s69
    %s73 = sphi 0, %s72
    %s89 = sphi 0, %s73
    %s93 = sphi 0, %s93
    %s95 = sphi 0, %s93
    %s96 = sphi 0, %s95
    %s110 = sphi 0, %s96
    %s114 = sphi 0, %s114
    %s116 = sphi 0, %s114
    %s117 = sphi 0, %s116
    %s131 = sphi 0, %s117
    %s137 = sphi 0, %s139
    %s140 = sphi 0, %s137
    %s141 = sphi 0, %s140
    %s157 = sphi 0, %s141
  $region4: #{rearranged_conv_lstm_grad_forward.1} parent=0 // loop_header_branch
    %15 = sbr.rel (%p13) target = $region8
  $region5: #{rearranged_conv_lstm_grad_forward.1} parent=0 // loop_body
    %s17 = ssub.s32 %s12, 1
    %s18 = ssub.s32 %s12, 2
    %s19 = sadd.s32 %s12, 1
    %s21 = sadd.s32 %s20, 1
    %p24 = scmp.eq.s32.totalorder %s12, 1
    %p25 = scmp.ne.s32.totalorder %s20, %s22
    %p26 = scmp.eq.s32.totalorder %s12, 0
    %p27 = por %p25, %p26
    %p28 = scmp.ne.s32.totalorder %s20, %s22
    %p29 = scmp.eq.s32.totalorder %s17, 1
    %p30 = por %p28, %p29
    %p31 = scmp.ne.s32.totalorder %s22, %s23
    %p32 = scmp.eq.s32.totalorder %s17, 0
    %p33 = por %p31, %p32
    %p34 = scmp.ne.s32.totalorder %s22, %s23
    %p35 = scmp.eq.s32.totalorder %s18, 1
    %p36 = por %p34, %p35
    %p38 = scmp.ne.s32.totalorder %s23, %s37
    %p39 = scmp.eq.s32.totalorder %s18, 0
    %p40 = por %p38, %p39
    %s41 = ssub.s32 %s12, %s19
    %p42 = scmp.eq.s32.totalorder %s41, 0
    %s44 = sadd.s32 %s43, 1
    %s45 = scalar_select %p42, %s43, %s44
    %p48 = pneg %p42
    %p49 = scmp.eq.s32.totalorder %s12, 1
    %p50 = por %p48, %p49
    %p51 = scmp.ne.s32.totalorder %s43, %s46
    %p52 = scmp.eq.s32.totalorder %s12, 0
    %p53 = por %p51, %p52
    %p54 = scmp.ne.s32.totalorder %s43, %s46
    %p55 = scmp.eq.s32.totalorder %s17, 1
    %p56 = por %p54, %p55
    %p57 = scmp.ne.s32.totalorder %s46, %s47
    %p58 = scmp.eq.s32.totalorder %s17, 0
    %p59 = por %p57, %p58
    %p60 = scmp.ne.s32.totalorder %s46, %s47
    %p61 = scmp.eq.s32.totalorder %s18, 1
    %p62 = por %p60, %p61
    %p64 = scmp.ne.s32.totalorder %s47, %s63
    %p65 = scmp.eq.s32.totalorder %s18, 0
    %p66 = por %p64, %p65
    %s67 = ssub.s32 %s12, %s19
    %p68 = scmp.eq.s32.totalorder %s67, 0
    %s70 = sadd.s32 %s69, 1
    %s71 = scalar_select %p68, %s69, %s70
    %p74 = pneg %p68
    %p75 = scmp.eq.s32.totalorder %s12, 1
    %p76 = por %p74, %p75
    %p77 = scmp.ne.s32.totalorder %s69, %s72
    %p78 = scmp.eq.s32.totalorder %s12, 0
    %p79 = por %p77, %p78
    %p80 = scmp.ne.s32.totalorder %s69, %s72
    %p81 = scmp.eq.s32.totalorder %s17, 1
    %p82 = por %p80, %p81
    %p83 = scmp.ne.s32.totalorder %s72, %s73
    %p84 = scmp.eq.s32.totalorder %s17, 0
    %p85 = por %p83, %p84
    %p86 = scmp.ne.s32.totalorder %s72, %s73
    %p87 = scmp.eq.s32.totalorder %s18, 1
    %p88 = por %p86, %p87
    %p90 = scmp.ne.s32.totalorder %s73, %s89
    %p91 = scmp.eq.s32.totalorder %s18, 0
    %p92 = por %p90, %p91
    %s94 = sadd.s32 %s93, 1
    %p97 = scmp.eq.s32.totalorder %s12, 1
    %p98 = scmp.ne.s32.totalorder %s93, %s95
    %p99 = scmp.eq.s32.totalorder %s12, 0
    %p100 = por %p98, %p99
    %p101 = scmp.ne.s32.totalorder %s93, %s95
    %p102 = scmp.eq.s32.totalorder %s17, 1
    %p103 = por %p101, %p102
    %p104 = scmp.ne.s32.totalorder %s95, %s96
    %p105 = scmp.eq.s32.totalorder %s17, 0
    %p106 = por %p104, %p105
    %p107 = scmp.ne.s32.totalorder %s95, %s96
    %p108 = scmp.eq.s32.totalorder %s18, 1
    %p109 = por %p107, %p108
    %p111 = scmp.ne.s32.totalorder %s96, %s110
    %p112 = scmp.eq.s32.totalorder %s18, 0
    %p113 = por %p111, %p112
    %s115 = sadd.s32 %s114, 1
    %p118 = scmp.eq.s32.totalorder %s12, 1
    %p119 = scmp.ne.s32.totalorder %s114, %s116
    %p120 = scmp.eq.s32.totalorder %s12, 0
    %p121 = por %p119, %p120
    %p122 = scmp.ne.s32.totalorder %s114, %s116
    %p123 = scmp.eq.s32.totalorder %s17, 1
    %p124 = por %p122, %p123
    %p125 = scmp.ne.s32.totalorder %s116, %s117
    %p126 = scmp.eq.s32.totalorder %s17, 0
    %p127 = por %p125, %p126
    %p128 = scmp.ne.s32.totalorder %s116, %s117
    %p129 = scmp.eq.s32.totalorder %s18, 1
    %p130 = por %p128, %p129
    %p132 = scmp.ne.s32.totalorder %s117, %s131
    %p133 = scmp.eq.s32.totalorder %s18, 0
    %p134 = por %p132, %p133
    %s135 = ssub.s32 %s12, %s19
    %p136 = scmp.eq.s32.totalorder %s135, 0
    %s138 = sadd.s32 %s137, 1
    %s139 = scalar_select %p136, %s137, %s138
    %p142 = pneg %p136
    %p143 = scmp.eq.s32.totalorder %s12, 1
    %p144 = por %p142, %p143
    %p145 = scmp.ne.s32.totalorder %s137, %s140
    %p146 = scmp.eq.s32.totalorder %s12, 0
    %p147 = por %p145, %p146
    %p148 = scmp.ne.s32.totalorder %s137, %s140
    %p149 = scmp.eq.s32.totalorder %s17, 1
    %p150 = por %p148, %p149
    %p151 = scmp.ne.s32.totalorder %s140, %s141
    %p152 = scmp.eq.s32.totalorder %s17, 0
    %p153 = por %p151, %p152
    %p154 = scmp.ne.s32.totalorder %s140, %s141
    %p155 = scmp.eq.s32.totalorder %s18, 1
    %p156 = por %p154, %p155
    %p158 = scmp.ne.s32.totalorder %s141, %s157
    %p159 = scmp.eq.s32.totalorder %s18, 0
    %p160 = por %p158, %p159
    %p161 = scmp.le.s32.totalorder 1, %s12
    %p162 = scmp.lt.s32.totalorder %s12, 3
    %p163 = pnand %p161, %p162
    %p164 = pneg %p163
    // Predicated region
    $region9: #{rearranged_conv_lstm_grad_forward.1} parent=5 // pred_check
      _
    $region10: #{rearranged_conv_lstm_grad_forward.1} parent=5 // pred_check_branch
      %166 = sbr.rel (%p163) target = $region12
    $region11: #{rearranged_conv_lstm_grad_forward.1} parent=5 // pred_region
      %s167 = ssub.s32 %s12, 1
      // Predicated region
      $region13: #{rearranged_conv_lstm_grad_forward.1} parent=11 // pred_check
        %p168 = pneg %p33
      $region14: #{rearranged_conv_lstm_grad_forward.1} parent=11 // pred_check_branch
        %170 = sbr.rel (%p168) target = $region16
      $region15: #{rearranged_conv_lstm_grad_forward.1} parent=11 // pred_region
        _
      $region16: #{rearranged_conv_lstm_grad_forward.1} parent=11 // pred_fallthru
        _
      // Predicated region
      $region17: #{rearranged_conv_lstm_grad_forward.1} parent=11 // pred_check
        %p171 = pneg %p106
      $region18: #{rearranged_conv_lstm_grad_forward.1} parent=11 // pred_check_branch
        %173 = sbr.rel (%p171) target = $region20
      $region19: #{rearranged_conv_lstm_grad_forward.1} parent=11 // pred_region
        _
      $region20: #{rearranged_conv_lstm_grad_forward.1} parent=11 // pred_fallthru
        _
      // Predicated region
      $region21: #{rearranged_conv_lstm_grad_forward.1} parent=11 // pred_check
        %p174 = pneg %p127
      $region22: #{rearranged_conv_lstm_grad_forward.1} parent=11 // pred_check_branch
        %176 = sbr.rel (%p174) target = $region24
      $region23: #{rearranged_conv_lstm_grad_forward.1} parent=11 // pred_region
        _
      $region24: #{rearranged_conv_lstm_grad_forward.1} parent=11 // pred_fallthru
        _
    $region12: #{rearranged_conv_lstm_grad_forward.1} parent=5 // pred_fallthru
      _
    %p177 = scmp.lt.s32.totalorder %s12, 2
    // Predicated region
    $region25: #{rearranged_conv_lstm_grad_forward.1} parent=5 // pred_check
      %p178 = pneg %p177
    $region26: #{rearranged_conv_lstm_grad_forward.1} parent=5 // pred_check_branch
      %180 = sbr.rel (%p178) target = $region28
    $region27: #{rearranged_conv_lstm_grad_forward.1} parent=5 // pred_region
      // Predicated region
      $region29: #{rearranged_conv_lstm_grad_forward.1} parent=27 // pred_check
        %p181 = pneg %p53
      $region30: #{rearranged_conv_lstm_grad_forward.1} parent=27 // pred_check_branch
        %183 = sbr.rel (%p181) target = $region32
      $region31: #{rearranged_conv_lstm_grad_forward.1} parent=27 // pred_region
        %p184 = scmp.lt.s32.totalorder %s12, 1
        %s185 = scalar_select %p184, %s12, 1
        %s186 = smul.addr %s185, 8
        %s187 = scalar_lea.vmem %s1, %s186
      $region32: #{rearranged_conv_lstm_grad_forward.1} parent=27 // pred_fallthru
        _
      // Predicated region
      $region33: #{rearranged_conv_lstm_grad_forward.1} parent=27 // pred_check
        %p188 = pneg %p79
      $region34: #{rearranged_conv_lstm_grad_forward.1} parent=27 // pred_check_branch
        %190 = sbr.rel (%p188) target = $region36
      $region35: #{rearranged_conv_lstm_grad_forward.1} parent=27 // pred_region
        %p191 = scmp.lt.s32.totalorder %s12, 1
        %s192 = scalar_select %p191, %s12, 1
        %s193 = smul.addr %s192, 8
        %s194 = scalar_lea.vmem %s2, %s193
      $region36: #{rearranged_conv_lstm_grad_forward.1} parent=27 // pred_fallthru
        _
    $region28: #{rearranged_conv_lstm_grad_forward.1} parent=5 // pred_fallthru
      _
    %p195 = scmp.le.s32.totalorder 1, %s12
    %p196 = scmp.lt.s32.totalorder %s12, 3
    %p197 = pnand %p195, %p196
    %p198 = pneg %p197
    // Predicated region
    $region37: #{rearranged_conv_lstm_grad_forward.1} parent=5 // pred_check
      _
    $region38: #{rearranged_conv_lstm_grad_forward.1} parent=5 // pred_check_branch
      %200 = sbr.rel (%p197) target = $region40
    $region39: #{rearranged_conv_lstm_grad_forward.1} parent=5 // pred_region
      %s201 = ssub.s32 %s12, 1
      %p202 = pneg %p33
      %p203 = pneg %p30
      %p204 = scmp.lt.s32.totalorder %s17, 1
      %s205 = scalar_select %p204, %s17, 1
      %s206 = smul.addr %s205, 8
      %s207 = scalar_lea.vmem %s1, %s206
      %p208 = pneg %p59
      %p209 = pneg %p56
      %p210 = scmp.lt.s32.totalorder %s17, 1
      %s211 = scalar_select %p210, %s17, 1
      %s212 = smul.addr %s211, 8
      %s213 = scalar_lea.vmem %s2, %s212
      %p214 = pneg %p85
      %p215 = pneg %p82
      %p216 = pneg %p106
      %p217 = pneg %p103
      %p218 = pneg %p127
      %p219 = pneg %p124
      %p220 = pneg %p153
      %p221 = pneg %p150
      %p222 = scmp.lt.s32.totalorder %s17, 1
      %s223 = scalar_select %p222, %s17, 1
      %s224 = smul.addr %s223, 8
      %s225 = scalar_lea.vmem %s5, %s224
      %p226 = scmp.lt.s32.totalorder %s17, 1
      %s227 = scalar_select %p226, %s17, 1
      %s228 = smul.addr %s227, 8
      %s229 = scalar_lea.vmem %s1, %s228
      %p230 = scmp.lt.s32.totalorder %s17, 1
      %s231 = scalar_select %p230, %s17, 1
      %s232 = smul.addr %s231, 8
      %s233 = scalar_lea.vmem %s2, %s232
      %p234 = scmp.lt.s32.totalorder %s17, 1
      %s235 = scalar_select %p234, %s17, 1
      %s236 = smul.addr %s235, 8
      %s237 = scalar_lea.vmem %s5, %s236
      %v239 = vld [vmem:[%s229] sm:$0xff]
      %v240 = vld [vmem:[%s233] sm:$0xff]
      %s241 = sld [smem:[#allocation2]]
      %v242 = vstv %s241
      %v243 = vmul.f32 %v240, %v242
      %v244 = vlaneseq
      %v245 = vand.u32 %v244, 127
      %vm246 = vcmp.lt.s32.totalorder %v245, 0
      %v247 = vsub.s32 0, %v245
      %v248 = vsel %vm246, %v247, %v245
      %v249 = vshrl.u32 %v248, 7
      %v250 = vand.u32 %v248, 127
      %v251 = vsub.s32 0, %v250
      %v252 = vsel %vm246, %v251, %v250
      %vm253 = vcmp.ne.s32.totalorder %v252, 0
      %vm254 = vcmp.lt.s32.totalorder %v252, 0
      %vm255 = vmand %vm254, %vm253
      %v256 = vadd.s32 %v252, 128
      %v257 = vsel %vm255, %v256, %v252
      %vm258 = vcmp.eq.s32.totalorder %v257, 0
      %vm259 = vcmp.eq.s32.totalorder %v257, 127
      %260 = vrot.lane.b32.xlu0 %v239, 1
      %v261 = vpop.permute.xlu0 %260
      %v262 = vsel %vm258, 0.0, %v261
      %263 = vrot.lane.b32.xlu0 %v239, 127
      %v264 = vpop.permute.xlu0 %263
      %v265 = vsel %vm259, 0.0, %v264
      %266 = vrot.lane.b32.xlu0 %v243, 1
      %v267 = vpop.permute.xlu0 %266
      %v268 = vsel %vm258, 0.0, %v267
      %269 = vrot.lane.b32.xlu0 %v243, 127
      %v270 = vpop.permute.xlu0 %269
      %v271 = vsel %vm259, 0.0, %v270
      %v272 = vld [vmem:[%s3] sm:$0xf]
      %v273 = vld [vmem:[%s3 + $0x8] sm:$0xf]
      %v274 = vld [vmem:[%s3 + $0x10] sm:$0xf]
      %v275 = vld [vmem:[%s3 + $0x18] sm:$0xf]
      %v276 = vld [vmem:[%s3 + $0x20] sm:$0xf]
      %v277 = vld [vmem:[%s3 + $0x28] sm:$0xf]
      %v278 = vld [vmem:[%s3 + $0x30] sm:$0xf]
      %v279 = vld [vmem:[%s3 + $0x38] sm:$0xf]
      %v280 = vld [vmem:[%s4] sm:$0xff]
      %v281 = vld [vmem:[%s4 + $0x8] sm:$0xff]
      %v282 = vld [vmem:[%s4 + $0x10] sm:$0xff]
      %v283 = vld [vmem:[%s4 + $0x18] sm:$0xff]
      %v284 = vld [vmem:[%s4 + $0x20] sm:$0xff]
      %v285 = vld [vmem:[%s4 + $0x28] sm:$0xff]
      %v286 = vld [vmem:[%s4 + $0x30] sm:$0xff]
      %v287 = vld [vmem:[%s4 + $0x38] sm:$0xff]
      %v288 = vpack.c.bf16 %v239, %v262
      %v289 = vpack.c.bf16 %v268, %v265
      %v290 = vpack.c.bf16 %v271, %v243
      %292 = vset.pattern.permute.xlu0 0
      %293 = vperm.xlu0 %292, %v280
      %v294 = vpop.permute.xlu0 %293
      %297 = vset.pattern.permute.xlu0 0
      %298 = vperm.xlu0 %297, %v281
      %v299 = vpop.permute.xlu0 %298
      %302 = vset.pattern.permute.xlu0 0
      %303 = vperm.xlu0 %302, %v282
      %v304 = vpop.permute.xlu0 %303
      %307 = vset.pattern.permute.xlu0 0
      %308 = vperm.xlu0 %307, %v283
      %v309 = vpop.permute.xlu0 %308
      %312 = vset.pattern.permute.xlu0 0
      %313 = vperm.xlu0 %312, %v284
      %v314 = vpop.permute.xlu0 %313
      %317 = vset.pattern.permute.xlu0 0
      %318 = vperm.xlu0 %317, %v285
      %v319 = vpop.permute.xlu0 %318
      %322 = vset.pattern.permute.xlu0 0
      %323 = vperm.xlu0 %322, %v286
      %v324 = vpop.permute.xlu0 %323
      %327 = vset.pattern.permute.xlu0 0
      %328 = vperm.xlu0 %327, %v287
      %v329 = vpop.permute.xlu0 %328
      %v339 = vunpack.c.l.b16 %v272
      %v340 = vunpack.c.l.b16 %v273
      %v341 = vunpack.c.l.b16 %v274
      %v342 = vunpack.c.l.b16 %v275
      %v343 = vunpack.c.l.b16 %v276
      %v344 = vunpack.c.l.b16 %v277
      %v345 = vunpack.c.l.b16 %v278
      %v346 = vunpack.c.l.b16 %v279
      %v347 = vpack.c.b16 %v340, %v339
      %v348 = vpack.c.b16 %v342, %v341
      %v349 = vpack.c.b16 %v344, %v343
      %v350 = vpack.c.b16 %v346, %v345
      %vm351 = vcmask 392192
      %v353 = vsel %vm351, %v347, 0
      %v356 = vsel %vm351, %v348, 0
      %v359 = vsel %vm351, %v349, 0
      %v362 = vsel %vm351, %v350, 0
      %364 = vmatpush.bf16.msra.mxu0 0
      %365 = vmatpush.bf16.msra.mxu0 0
      %366 = vmatpush.bf16.msra.mxu0 0
      %367 = vmatpush.bf16.msra.mxu0 0
      %368 = vmatpush.bf16.msra.mxu0 0
      %369 = vmatpush.bf16.msra.mxu0 %v290
      %370 = vmatpush.bf16.msra.mxu0 %v289
      %371 = vmatpush.bf16.msra.mxu0 %v288
      %372 = vmatmul.bf16.gmra.mxu0 %v353
      %v373 = vpop.f32.mrf.mxu0
      %v374 = vadd.f32 %v294, %v373
      %v375 = vpop.f32.mrf.mxu0
      %v376 = vadd.f32 %v299, %v375
      %377 = vmatmul.bf16.gmra.mxu0 %v356
      %v378 = vpop.f32.mrf.mxu0
      %v379 = vadd.f32 %v304, %v378
      %v380 = vpop.f32.mrf.mxu0
      %v381 = vadd.f32 %v309, %v380
      %382 = vmatmul.bf16.gmra.mxu0 %v359
      %v383 = vpop.f32.mrf.mxu0
      %v384 = vadd.f32 %v314, %v383
      %v385 = vpop.f32.mrf.mxu0
      %v386 = vadd.f32 %v319, %v385
      %387 = vmatmul.bf16.gmra.mxu0 %v362
      %v388 = vpop.f32.mrf.mxu0
      %v389 = vadd.f32 %v324, %v388
      %v390 = vpop.f32.mrf.mxu0
      %v391 = vadd.f32 %v329, %v390
      %392 = vdwg.mxu0
      %393 = vrot.lane.b32.xlu0 %v384, 1
      %v394 = vpop.permute.xlu0 %393
      %395 = vrot.lane.b32.xlu0 %v386, 1
      %v396 = vpop.permute.xlu0 %395
      %397 = vrot.lane.b32.xlu0 %v389, 1
      %v398 = vpop.permute.xlu0 %397
      %399 = vrot.lane.b32.xlu0 %v391, 1
      %v400 = vpop.permute.xlu0 %399
      %v401 = vsel %vm258, 0.0, %v394
      %v402 = vsel %vm258, 0.0, %v396
      %v403 = vsel %vm258, 0.0, %v398
      %v404 = vsel %vm258, 0.0, %v400
      %405 = vrot.lane.b32.xlu0 %v384, 127
      %v406 = vpop.permute.xlu0 %405
      %407 = vrot.lane.b32.xlu0 %v386, 127
      %v408 = vpop.permute.xlu0 %407
      %409 = vrot.lane.b32.xlu0 %v389, 127
      %v410 = vpop.permute.xlu0 %409
      %411 = vrot.lane.b32.xlu0 %v391, 127
      %v412 = vpop.permute.xlu0 %411
      %v413 = vsel %vm259, 0.0, %v406
      %v414 = vsel %vm259, 0.0, %v408
      %v415 = vsel %vm259, 0.0, %v410
      %v416 = vsel %vm259, 0.0, %v412
      %v417 = vmul.f32 %v401, %v401
      %v418 = vmul.f32 %v402, %v402
      %v419 = vmul.f32 %v403, %v403
      %v420 = vmul.f32 %v404, %v404
      %v421 = vmul.f32 %v384, %v384
      %v422 = vmul.f32 %v386, %v386
      %v423 = vmul.f32 %v389, %v389
      %v424 = vmul.f32 %v391, %v391
      %v425 = vmul.f32 %v413, %v413
      %v426 = vmul.f32 %v414, %v414
      %v427 = vmul.f32 %v415, %v415
      %v428 = vmul.f32 %v416, %v416
      %v429 = vld [vmem:[%s3 + $0x40] sm:$0xff]
      %v430 = vld [vmem:[%s3 + $0x48] sm:$0xff]
      %v431 = vld [vmem:[%s3 + $0x50] sm:$0xff]
      %v432 = vld [vmem:[%s3 + $0x58] sm:$0xff]
      %v433 = vld [vmem:[%s3 + $0x60] sm:$0xff]
      %v434 = vld [vmem:[%s3 + $0x68] sm:$0xff]
      %v435 = vld [vmem:[%s3 + $0x70] sm:$0xff]
      %v436 = vld [vmem:[%s3 + $0x78] sm:$0xff]
      %v437 = vld [vmem:[%s3 + $0x80] sm:$0xff]
      %v438 = vld [vmem:[%s3 + $0x88] sm:$0xff]
      %v439 = vld [vmem:[%s3 + $0x90] sm:$0xff]
      %v440 = vld [vmem:[%s3 + $0x98] sm:$0xff]
      %v441 = vld [vmem:[%s3 + $0xa0] sm:$0xff]
      %v442 = vld [vmem:[%s3 + $0xa8] sm:$0xff]
      %v443 = vld [vmem:[%s3 + $0xb0] sm:$0xff]
      %v444 = vld [vmem:[%s3 + $0xb8] sm:$0xff]
      %v445 = vld [vmem:[%s3 + $0xc0] sm:$0xff]
      %v446 = vld [vmem:[%s3 + $0xc8] sm:$0xff]
      %v447 = vld [vmem:[%s3 + $0xd0] sm:$0xff]
      %v448 = vld [vmem:[%s3 + $0xd8] sm:$0xff]
      %v449 = vld [vmem:[%s3 + $0xe0] sm:$0xff]
      %v450 = vld [vmem:[%s3 + $0xe8] sm:$0xff]
      %v451 = vld [vmem:[%s3 + $0xf0] sm:$0xff]
      %v452 = vld [vmem:[%s3 + $0xf8] sm:$0xff]
      %v453 = vld [vmem:[%s4 + $0x40] sm:$0xff]
      %v454 = vld [vmem:[%s4 + $0x48] sm:$0xff]
      %v455 = vld [vmem:[%s4 + $0x50] sm:$0xff]
      %v456 = vld [vmem:[%s4 + $0x58] sm:$0xff]
      %v457 = vld [vmem:[%s4 + $0x60] sm:$0xff]
      %v458 = vld [vmem:[%s4 + $0x68] sm:$0xff]
      %v459 = vld [vmem:[%s4 + $0x70] sm:$0xff]
      %v460 = vld [vmem:[%s4 + $0x78] sm:$0xff]
      %v461 = vld [vmem:[%s4 + $0x80] sm:$0xff]
      %v462 = vld [vmem:[%s4 + $0x88] sm:$0xff]
      %v463 = vld [vmem:[%s4 + $0x90] sm:$0xff]
      %v464 = vld [vmem:[%s4 + $0x98] sm:$0xff]
      %v465 = vld [vmem:[%s4 + $0xa0] sm:$0xff]
      %v466 = vld [vmem:[%s4 + $0xa8] sm:$0xff]
      %v467 = vld [vmem:[%s4 + $0xb0] sm:$0xff]
      %v468 = vld [vmem:[%s4 + $0xb8] sm:$0xff]
      %v469 = vld [vmem:[%s4 + $0xc0] sm:$0xff]
      %v470 = vld [vmem:[%s4 + $0xc8] sm:$0xff]
      %v471 = vld [vmem:[%s4 + $0xd0] sm:$0xff]
      %v472 = vld [vmem:[%s4 + $0xd8] sm:$0xff]
      %v473 = vld [vmem:[%s4 + $0xe0] sm:$0xff]
      %v474 = vld [vmem:[%s4 + $0xe8] sm:$0xff]
      %v475 = vld [vmem:[%s4 + $0xf0] sm:$0xff]
      %v476 = vld [vmem:[%s4 + $0xf8] sm:$0xff]
      %v477 = vpack.c.bf16 %v402, %v401
      %v478 = vpack.c.bf16 %v404, %v403
      %v479 = vpack.c.bf16 %v386, %v384
      %v480 = vpack.c.bf16 %v391, %v389
      %v481 = vpack.c.bf16 %v414, %v413
      %v482 = vpack.c.bf16 %v416, %v415
      %v483 = vpack.c.bf16 %v418, %v417
      %v484 = vpack.c.bf16 %v420, %v419
      %v485 = vpack.c.bf16 %v422, %v421
      %v486 = vpack.c.bf16 %v424, %v423
      %v487 = vpack.c.bf16 %v426, %v425
      %v488 = vpack.c.bf16 %v428, %v427
      %490 = vset.pattern.permute.xlu0 0
      %491 = vperm.xlu0 %490, %v453
      %v492 = vpop.permute.xlu0 %491
      %495 = vset.pattern.permute.xlu0 0
      %496 = vperm.xlu0 %495, %v454
      %v497 = vpop.permute.xlu0 %496
      %500 = vset.pattern.permute.xlu0 0
      %501 = vperm.xlu0 %500, %v455
      %v502 = vpop.permute.xlu0 %501
      %505 = vset.pattern.permute.xlu0 0
      %506 = vperm.xlu0 %505, %v456
      %v507 = vpop.permute.xlu0 %506
      %510 = vset.pattern.permute.xlu0 0
      %511 = vperm.xlu0 %510, %v457
      %v512 = vpop.permute.xlu0 %511
      %515 = vset.pattern.permute.xlu0 0
      %516 = vperm.xlu0 %515, %v458
      %v517 = vpop.permute.xlu0 %516
      %520 = vset.pattern.permute.xlu0 0
      %521 = vperm.xlu0 %520, %v459
      %v522 = vpop.permute.xlu0 %521
      %525 = vset.pattern.permute.xlu0 0
      %526 = vperm.xlu0 %525, %v460
      %v527 = vpop.permute.xlu0 %526
      %530 = vset.pattern.permute.xlu0 0
      %531 = vperm.xlu0 %530, %v461
      %v532 = vpop.permute.xlu0 %531
      %535 = vset.pattern.permute.xlu0 0
      %536 = vperm.xlu0 %535, %v462
      %v537 = vpop.permute.xlu0 %536
      %540 = vset.pattern.permute.xlu0 0
      %541 = vperm.xlu0 %540, %v463
      %v542 = vpop.permute.xlu0 %541
      %545 = vset.pattern.permute.xlu0 0
      %546 = vperm.xlu0 %545, %v464
      %v547 = vpop.permute.xlu0 %546
      %550 = vset.pattern.permute.xlu0 0
      %551 = vperm.xlu0 %550, %v465
      %v552 = vpop.permute.xlu0 %551
      %555 = vset.pattern.permute.xlu0 0
      %556 = vperm.xlu0 %555, %v466
      %v557 = vpop.permute.xlu0 %556
      %560 = vset.pattern.permute.xlu0 0
      %561 = vperm.xlu0 %560, %v467
      %v562 = vpop.permute.xlu0 %561
      %565 = vset.pattern.permute.xlu0 0
      %566 = vperm.xlu0 %565, %v468
      %v567 = vpop.permute.xlu0 %566
      %570 = vset.pattern.permute.xlu0 0
      %571 = vperm.xlu0 %570, %v469
      %v572 = vpop.permute.xlu0 %571
      %575 = vset.pattern.permute.xlu0 0
      %576 = vperm.xlu0 %575, %v470
      %v577 = vpop.permute.xlu0 %576
      %580 = vset.pattern.permute.xlu0 0
      %581 = vperm.xlu0 %580, %v471
      %v582 = vpop.permute.xlu0 %581
      %585 = vset.pattern.permute.xlu0 0
      %586 = vperm.xlu0 %585, %v472
      %v587 = vpop.permute.xlu0 %586
      %590 = vset.pattern.permute.xlu0 0
      %591 = vperm.xlu0 %590, %v473
      %v592 = vpop.permute.xlu0 %591
      %595 = vset.pattern.permute.xlu0 0
      %596 = vperm.xlu0 %595, %v474
      %v597 = vpop.permute.xlu0 %596
      %600 = vset.pattern.permute.xlu0 0
      %601 = vperm.xlu0 %600, %v475
      %v602 = vpop.permute.xlu0 %601
      %605 = vset.pattern.permute.xlu0 0
      %606 = vperm.xlu0 %605, %v476
      %v607 = vpop.permute.xlu0 %606
      %v633 = vunpack.c.l.b16 %v429
      %v634 = vunpack.c.h.b16 %v429
      %v635 = vunpack.c.l.b16 %v430
      %v636 = vunpack.c.h.b16 %v430
      %v637 = vunpack.c.l.b16 %v431
      %v638 = vunpack.c.h.b16 %v431
      %v639 = vunpack.c.l.b16 %v432
      %v640 = vunpack.c.h.b16 %v432
      %v641 = vunpack.c.l.b16 %v433
      %v642 = vunpack.c.h.b16 %v433
      %v643 = vunpack.c.l.b16 %v434
      %v644 = vunpack.c.h.b16 %v434
      %v645 = vunpack.c.l.b16 %v435
      %v646 = vunpack.c.h.b16 %v435
      %v647 = vunpack.c.l.b16 %v436
      %v648 = vunpack.c.h.b16 %v436
      %v649 = vunpack.c.l.b16 %v437
      %v650 = vunpack.c.h.b16 %v437
      %v651 = vunpack.c.l.b16 %v438
      %v652 = vunpack.c.h.b16 %v438
      %v653 = vunpack.c.l.b16 %v439
      %v654 = vunpack.c.h.b16 %v439
      %v655 = vunpack.c.l.b16 %v440
      %v656 = vunpack.c.h.b16 %v440
      %v657 = vunpack.c.l.b16 %v441
      %v658 = vunpack.c.h.b16 %v441
      %v659 = vunpack.c.l.b16 %v442
      %v660 = vunpack.c.h.b16 %v442
      %v661 = vunpack.c.l.b16 %v443
      %v662 = vunpack.c.h.b16 %v443
      %v663 = vunpack.c.l.b16 %v444
      %v664 = vunpack.c.h.b16 %v444
      %v665 = vunpack.c.l.b16 %v445
      %v666 = vunpack.c.h.b16 %v445
      %v667 = vunpack.c.l.b16 %v446
      %v668 = vunpack.c.h.b16 %v446
      %v669 = vunpack.c.l.b16 %v447
      %v670 = vunpack.c.h.b16 %v447
      %v671 = vunpack.c.l.b16 %v448
      %v672 = vunpack.c.h.b16 %v448
      %v673 = vunpack.c.l.b16 %v449
      %v674 = vunpack.c.h.b16 %v449
      %v675 = vunpack.c.l.b16 %v450
      %v676 = vunpack.c.h.b16 %v450
      %v677 = vunpack.c.l.b16 %v451
      %v678 = vunpack.c.h.b16 %v451
      %v679 = vunpack.c.l.b16 %v452
      %v680 = vunpack.c.h.b16 %v452
      %v681 = vpack.c.b16 %v635, %v633
      %v682 = vpack.c.b16 %v636, %v634
      %v683 = vpack.c.b16 %v639, %v637
      %v684 = vpack.c.b16 %v640, %v638
      %v685 = vpack.c.b16 %v643, %v641
      %v686 = vpack.c.b16 %v644, %v642
      %v687 = vpack.c.b16 %v647, %v645
      %v688 = vpack.c.b16 %v648, %v646
      %v689 = vpack.c.b16 %v651, %v649
      %v690 = vpack.c.b16 %v652, %v650
      %v691 = vpack.c.b16 %v655, %v653
      %v692 = vpack.c.b16 %v656, %v654
      %v693 = vpack.c.b16 %v659, %v657
      %v694 = vpack.c.b16 %v660, %v658
      %v695 = vpack.c.b16 %v663, %v661
      %v696 = vpack.c.b16 %v664, %v662
      %v697 = vpack.c.b16 %v667, %v665
      %v698 = vpack.c.b16 %v668, %v666
      %v699 = vpack.c.b16 %v671, %v669
      %v700 = vpack.c.b16 %v672, %v670
      %v701 = vpack.c.b16 %v675, %v673
      %v702 = vpack.c.b16 %v676, %v674
      %v703 = vpack.c.b16 %v679, %v677
      %v704 = vpack.c.b16 %v680, %v678
      %vm717 = vcmask 523264
      %v719 = vsel %vm717, %v682, 0
      %v722 = vsel %vm717, %v684, 0
      %v725 = vsel %vm717, %v686, 0
      %v728 = vsel %vm717, %v688, 0
      %v731 = vsel %vm717, %v690, 0
      %v734 = vsel %vm717, %v692, 0
      %v737 = vsel %vm717, %v694, 0
      %v740 = vsel %vm717, %v696, 0
      %v743 = vsel %vm717, %v698, 0
      %v746 = vsel %vm717, %v700, 0
      %v749 = vsel %vm717, %v702, 0
      %v752 = vsel %vm717, %v704, 0
      %754 = vmatpush.bf16.msra.mxu0 %v484
      %755 = vmatpush.bf16.msra.mxu0 %v483
      %756 = vmatpush.bf16.msra.mxu0 %v482
      %757 = vmatpush.bf16.msra.mxu0 %v481
      %758 = vmatpush.bf16.msra.mxu0 %v480
      %759 = vmatpush.bf16.msra.mxu0 %v479
      %760 = vmatpush.bf16.msra.mxu0 %v478
      %761 = vmatpush.bf16.msra.mxu0 %v477
      %762 = vmatmul.bf16.gmra.mxu0 %v681
      %v763 = vpop.f32.mrf.mxu0
      %v764 = vadd.f32 %v492, %v763
      %v765 = vpop.f32.mrf.mxu0
      %v766 = vadd.f32 %v497, %v765
      %767 = vmatmul.bf16.gmra.mxu0 %v683
      %v768 = vpop.f32.mrf.mxu0
      %v769 = vadd.f32 %v502, %v768
      %v770 = vpop.f32.mrf.mxu0
      %v771 = vadd.f32 %v507, %v770
      %772 = vmatmul.bf16.gmra.mxu0 %v685
      %v773 = vpop.f32.mrf.mxu0
      %v774 = vadd.f32 %v512, %v773
      %v775 = vpop.f32.mrf.mxu0
      %v776 = vadd.f32 %v517, %v775
      %777 = vmatmul.bf16.gmra.mxu0 %v687
      %v778 = vpop.f32.mrf.mxu0
      %v779 = vadd.f32 %v522, %v778
      %v780 = vpop.f32.mrf.mxu0
      %v781 = vadd.f32 %v527, %v780
      %782 = vmatmul.bf16.gmra.mxu0 %v689
      %v783 = vpop.f32.mrf.mxu0
      %v784 = vadd.f32 %v532, %v783
      %v785 = vpop.f32.mrf.mxu0
      %v786 = vadd.f32 %v537, %v785
      %787 = vmatmul.bf16.gmra.mxu0 %v691
      %v788 = vpop.f32.mrf.mxu0
      %v789 = vadd.f32 %v542, %v788
      %v790 = vpop.f32.mrf.mxu0
      %v791 = vadd.f32 %v547, %v790
      %792 = vmatmul.bf16.gmra.mxu0 %v693
      %v793 = vpop.f32.mrf.mxu0
      %v794 = vadd.f32 %v552, %v793
      %v795 = vpop.f32.mrf.mxu0
      %v796 = vadd.f32 %v557, %v795
      %797 = vmatmul.bf16.gmra.mxu0 %v695
      %v798 = vpop.f32.mrf.mxu0
      %v799 = vadd.f32 %v562, %v798
      %v800 = vpop.f32.mrf.mxu0
      %v801 = vadd.f32 %v567, %v800
      %802 = vmatmul.bf16.gmra.mxu0 %v697
      %v803 = vpop.f32.mrf.mxu0
      %v804 = vadd.f32 %v572, %v803
      %v805 = vpop.f32.mrf.mxu0
      %v806 = vadd.f32 %v577, %v805
      %807 = vmatmul.bf16.gmra.mxu0 %v699
      %v808 = vpop.f32.mrf.mxu0
      %v809 = vadd.f32 %v582, %v808
      %v810 = vpop.f32.mrf.mxu0
      %v811 = vadd.f32 %v587, %v810
      %812 = vmatmul.bf16.gmra.mxu0 %v701
      %v813 = vpop.f32.mrf.mxu0
      %v814 = vadd.f32 %v592, %v813
      %v815 = vpop.f32.mrf.mxu0
      %v816 = vadd.f32 %v597, %v815
      %817 = vmatmul.bf16.gmra.mxu0 %v703
      %v818 = vpop.f32.mrf.mxu0
      %v819 = vadd.f32 %v602, %v818
      %v820 = vpop.f32.mrf.mxu0
      %v821 = vadd.f32 %v607, %v820
      %822 = vdwg.mxu0
      %823 = vmatpush.bf16.msra.mxu0 0
      %824 = vmatpush.bf16.msra.mxu0 0
      %825 = vmatpush.bf16.msra.mxu0 0
      %826 = vmatpush.bf16.msra.mxu0 0
      %827 = vmatpush.bf16.msra.mxu0 %v488
      %828 = vmatpush.bf16.msra.mxu0 %v487
      %829 = vmatpush.bf16.msra.mxu0 %v486
      %830 = vmatpush.bf16.msra.mxu0 %v485
      %831 = vmatmul.bf16.gmra.mxu0 %v719
      %v832 = vpop.f32.mrf.mxu0
      %v833 = vadd.f32 %v764, %v832
      %v834 = vpop.f32.mrf.mxu0
      %v835 = vadd.f32 %v766, %v834
      %836 = vmatmul.bf16.gmra.mxu0 %v722
      %v837 = vpop.f32.mrf.mxu0
      %v838 = vadd.f32 %v769, %v837
      %v839 = vpop.f32.mrf.mxu0
      %v840 = vadd.f32 %v771, %v839
      %841 = vmatmul.bf16.gmra.mxu0 %v725
      %v842 = vpop.f32.mrf.mxu0
      %v843 = vadd.f32 %v774, %v842
      %v844 = vpop.f32.mrf.mxu0
      %v845 = vadd.f32 %v776, %v844
      %846 = vmatmul.bf16.gmra.mxu0 %v728
      %v847 = vpop.f32.mrf.mxu0
      %v848 = vadd.f32 %v779, %v847
      %v849 = vpop.f32.mrf.mxu0
      %v850 = vadd.f32 %v781, %v849
      %851 = vmatmul.bf16.gmra.mxu0 %v731
      %v852 = vpop.f32.mrf.mxu0
      %v853 = vadd.f32 %v784, %v852
      %v854 = vpop.f32.mrf.mxu0
      %v855 = vadd.f32 %v786, %v854
      %856 = vmatmul.bf16.gmra.mxu0 %v734
      %v857 = vpop.f32.mrf.mxu0
      %v858 = vadd.f32 %v789, %v857
      %v859 = vpop.f32.mrf.mxu0
      %v860 = vadd.f32 %v791, %v859
      %861 = vmatmul.bf16.gmra.mxu0 %v737
      %v862 = vpop.f32.mrf.mxu0
      %v863 = vadd.f32 %v794, %v862
      %v864 = vpop.f32.mrf.mxu0
      %v865 = vadd.f32 %v796, %v864
      %866 = vmatmul.bf16.gmra.mxu0 %v740
      %v867 = vpop.f32.mrf.mxu0
      %v868 = vadd.f32 %v799, %v867
      %v869 = vpop.f32.mrf.mxu0
      %v870 = vadd.f32 %v801, %v869
      %871 = vmatmul.bf16.gmra.mxu0 %v743
      %v872 = vpop.f32.mrf.mxu0
      %v873 = vadd.f32 %v804, %v872
      %v874 = vpop.f32.mrf.mxu0
      %v875 = vadd.f32 %v806, %v874
      %876 = vmatmul.bf16.gmra.mxu0 %v746
      %v877 = vpop.f32.mrf.mxu0
      %v878 = vadd.f32 %v809, %v877
      %v879 = vpop.f32.mrf.mxu0
      %v880 = vadd.f32 %v811, %v879
      %881 = vmatmul.bf16.gmra.mxu0 %v749
      %v882 = vpop.f32.mrf.mxu0
      %v883 = vadd.f32 %v814, %v882
      %v884 = vpop.f32.mrf.mxu0
      %v885 = vadd.f32 %v816, %v884
      %886 = vmatmul.bf16.gmra.mxu0 %v752
      %v887 = vpop.f32.mrf.mxu0
      %v888 = vadd.f32 %v819, %v887
      %v889 = vpop.f32.mrf.mxu0
      %v890 = vadd.f32 %v821, %v889
      %891 = vdwg.mxu0
      %v892 = vxor.u32 %v833, 2147483648
      %v893 = vxor.u32 %v835, 2147483648
      %v894 = vxor.u32 %v838, 2147483648
      %v895 = vxor.u32 %v840, 2147483648
      %v896 = vmul.f32 %v892, 1.442695
      %v897 = vpow.pop %v896
      %v898 = vmul.f32 %v893, 1.442695
      %v899 = vpow.pop %v898
      %v900 = vmul.f32 %v894, 1.442695
      %v901 = vpow.pop %v900
      %v902 = vmul.f32 %v895, 1.442695
      %v903 = vpow.pop %v902
      %v904 = vadd.f32 %v897, 1.0
      %v905 = vadd.f32 %v899, 1.0
      %v906 = vadd.f32 %v901, 1.0
      %v907 = vadd.f32 %v903, 1.0
      %v908 = vrcp.pop %v904
      %v909 = vmul.f32 %v904, %v908
      %v910 = vsub.f32 1.0, %v909
      %v911 = vmul.f32 %v908, %v910
      %v912 = vadd.f32 %v908, %v911
      %vm913 = vweird.f32 %v904
      %vm914 = vweird.f32 %v908
      %vm915 = vmor %vm913, %vm914
      %v916 = vsel %vm915, %v908, %v912
      %v917 = vand.u32 2147483647, %v904
      %vm918 = vcmp.eq.f32.partialorder %v917, 8.507059e+37
      %v919 = vand.u32 %v904, 2147483648
      %v920 = vor.u32 1.1754944e-38, %v919
      %v921 = vsel %vm918, %v920, %v916
      %v922 = vmul.f32 1.0, %v921
      %v923 = vrcp.pop %v905
      %v924 = vmul.f32 %v905, %v923
      %v925 = vsub.f32 1.0, %v924
      %v926 = vmul.f32 %v923, %v925
      %v927 = vadd.f32 %v923, %v926
      %vm928 = vweird.f32 %v905
      %vm929 = vweird.f32 %v923
      %vm930 = vmor %vm928, %vm929
      %v931 = vsel %vm930, %v923, %v927
      %v932 = vand.u32 2147483647, %v905
      %vm933 = vcmp.eq.f32.partialorder %v932, 8.507059e+37
      %v934 = vand.u32 %v905, 2147483648
      %v935 = vor.u32 1.1754944e-38, %v934
      %v936 = vsel %vm933, %v935, %v931
      %v937 = vmul.f32 1.0, %v936
      %v938 = vrcp.pop %v906
      %v939 = vmul.f32 %v906, %v938
      %v940 = vsub.f32 1.0, %v939
      %v941 = vmul.f32 %v938, %v940
      %v942 = vadd.f32 %v938, %v941
      %vm943 = vweird.f32 %v906
      %vm944 = vweird.f32 %v938
      %vm945 = vmor %vm943, %vm944
      %v946 = vsel %vm945, %v938, %v942
      %v947 = vand.u32 2147483647, %v906
      %vm948 = vcmp.eq.f32.partialorder %v947, 8.507059e+37
      %v949 = vand.u32 %v906, 2147483648
      %v950 = vor.u32 1.1754944e-38, %v949
      %v951 = vsel %vm948, %v950, %v946
      %v952 = vmul.f32 1.0, %v951
      %v953 = vrcp.pop %v907
      %v954 = vmul.f32 %v907, %v953
      %v955 = vsub.f32 1.0, %v954
      %v956 = vmul.f32 %v953, %v955
      %v957 = vadd.f32 %v953, %v956
      %vm958 = vweird.f32 %v907
      %vm959 = vweird.f32 %v953
      %vm960 = vmor %vm958, %vm959
      %v961 = vsel %vm960, %v953, %v957
      %v962 = vand.u32 2147483647, %v907
      %vm963 = vcmp.eq.f32.partialorder %v962, 8.507059e+37
      %v964 = vand.u32 %v907, 2147483648
      %v965 = vor.u32 1.1754944e-38, %v964
      %v966 = vsel %vm963, %v965, %v961
      %v967 = vmul.f32 1.0, %v966
      %v968 = vtanh.pop %v853
      %v969 = vtanh.pop %v855
      %v970 = vtanh.pop %v858
      %v971 = vtanh.pop %v860
      %v972 = vmul.f32 %v922, %v968
      %v973 = vmul.f32 %v937, %v969
      %v974 = vmul.f32 %v952, %v970
      %v975 = vmul.f32 %v967, %v971
      %v976 = vxor.u32 %v843, 2147483648
      %v977 = vxor.u32 %v845, 2147483648
      %v978 = vxor.u32 %v848, 2147483648
      %v979 = vxor.u32 %v850, 2147483648
      %v980 = vmul.f32 %v976, 1.442695
      %v981 = vpow.pop %v980
      %v982 = vmul.f32 %v977, 1.442695
      %v983 = vpow.pop %v982
      %v984 = vmul.f32 %v978, 1.442695
      %v985 = vpow.pop %v984
      %v986 = vmul.f32 %v979, 1.442695
      %v987 = vpow.pop %v986
      %v988 = vadd.f32 %v981, 1.0
      %v989 = vadd.f32 %v983, 1.0
      %v990 = vadd.f32 %v985, 1.0
      %v991 = vadd.f32 %v987, 1.0
      %v992 = vrcp.pop %v988
      %v993 = vmul.f32 %v988, %v992
      %v994 = vsub.f32 1.0, %v993
      %v995 = vmul.f32 %v992, %v994
      %v996 = vadd.f32 %v992, %v995
      %vm997 = vweird.f32 %v988
      %vm998 = vweird.f32 %v992
      %vm999 = vmor %vm997, %vm998
      %v1000 = vsel %vm999, %v992, %v996
      %v1001 = vand.u32 2147483647, %v988
      %vm1002 = vcmp.eq.f32.partialorder %v1001, 8.507059e+37
      %v1003 = vand.u32 %v988, 2147483648
      %v1004 = vor.u32 1.1754944e-38, %v1003
      %v1005 = vsel %vm1002, %v1004, %v1000
      %v1006 = vmul.f32 1.0, %v1005
      %v1007 = vrcp.pop %v989
      %v1008 = vmul.f32 %v989, %v1007
      %v1009 = vsub.f32 1.0, %v1008
      %v1010 = vmul.f32 %v1007, %v1009
      %v1011 = vadd.f32 %v1007, %v1010
      %vm1012 = vweird.f32 %v989
      %vm1013 = vweird.f32 %v1007
      %vm1014 = vmor %vm1012, %vm1013
      %v1015 = vsel %vm1014, %v1007, %v1011
      %v1016 = vand.u32 2147483647, %v989
      %vm1017 = vcmp.eq.f32.partialorder %v1016, 8.507059e+37
      %v1018 = vand.u32 %v989, 2147483648
      %v1019 = vor.u32 1.1754944e-38, %v1018
      %v1020 = vsel %vm1017, %v1019, %v1015
      %v1021 = vmul.f32 1.0, %v1020
      %v1022 = vrcp.pop %v990
      %v1023 = vmul.f32 %v990, %v1022
      %v1024 = vsub.f32 1.0, %v1023
      %v1025 = vmul.f32 %v1022, %v1024
      %v1026 = vadd.f32 %v1022, %v1025
      %vm1027 = vweird.f32 %v990
      %vm1028 = vweird.f32 %v1022
      %vm1029 = vmor %vm1027, %vm1028
      %v1030 = vsel %vm1029, %v1022, %v1026
      %v1031 = vand.u32 2147483647, %v990
      %vm1032 = vcmp.eq.f32.partialorder %v1031, 8.507059e+37
      %v1033 = vand.u32 %v990, 2147483648
      %v1034 = vor.u32 1.1754944e-38, %v1033
      %v1035 = vsel %vm1032, %v1034, %v1030
      %v1036 = vmul.f32 1.0, %v1035
      %v1037 = vrcp.pop %v991
      %v1038 = vmul.f32 %v991, %v1037
      %v1039 = vsub.f32 1.0, %v1038
      %v1040 = vmul.f32 %v1037, %v1039
      %v1041 = vadd.f32 %v1037, %v1040
      %vm1042 = vweird.f32 %v991
      %vm1043 = vweird.f32 %v1037
      %vm1044 = vmor %vm1042, %vm1043
      %v1045 = vsel %vm1044, %v1037, %v1041
      %v1046 = vand.u32 2147483647, %v991
      %vm1047 = vcmp.eq.f32.partialorder %v1046, 8.507059e+37
      %v1048 = vand.u32 %v991, 2147483648
      %v1049 = vor.u32 1.1754944e-38, %v1048
      %v1050 = vsel %vm1047, %v1049, %v1045
      %v1051 = vmul.f32 1.0, %v1050
      %v1052 = vtanh.pop %v972
      %v1053 = vtanh.pop %v973
      %v1054 = vtanh.pop %v974
      %v1055 = vtanh.pop %v975
      %v1056 = vmul.f32 %v1006, %v1052
      %v1057 = vmul.f32 %v1021, %v1053
      %v1058 = vmul.f32 %v1036, %v1054
      %v1059 = vmul.f32 %v1051, %v1055
      %v1060 = vxor.u32 %v863, 2147483648
      %v1061 = vxor.u32 %v865, 2147483648
      %v1062 = vxor.u32 %v868, 2147483648
      %v1063 = vxor.u32 %v870, 2147483648
      %v1064 = vmul.f32 %v1060, 1.442695
      %v1065 = vpow.pop %v1064
      %v1066 = vmul.f32 %v1061, 1.442695
      %v1067 = vpow.pop %v1066
      %v1068 = vmul.f32 %v1062, 1.442695
      %v1069 = vpow.pop %v1068
      %v1070 = vmul.f32 %v1063, 1.442695
      %v1071 = vpow.pop %v1070
      %v1072 = vadd.f32 %v1065, 1.0
      %v1073 = vadd.f32 %v1067, 1.0
      %v1074 = vadd.f32 %v1069, 1.0
      %v1075 = vadd.f32 %v1071, 1.0
      %v1076 = vrcp.pop %v1072
      %v1077 = vmul.f32 %v1072, %v1076
      %v1078 = vsub.f32 1.0, %v1077
      %v1079 = vmul.f32 %v1076, %v1078
      %v1080 = vadd.f32 %v1076, %v1079
      %vm1081 = vweird.f32 %v1072
      %vm1082 = vweird.f32 %v1076
      %vm1083 = vmor %vm1081, %vm1082
      %v1084 = vsel %vm1083, %v1076, %v1080
      %v1085 = vand.u32 2147483647, %v1072
      %vm1086 = vcmp.eq.f32.partialorder %v1085, 8.507059e+37
      %v1087 = vand.u32 %v1072, 2147483648
      %v1088 = vor.u32 1.1754944e-38, %v1087
      %v1089 = vsel %vm1086, %v1088, %v1084
      %v1090 = vmul.f32 1.0, %v1089
      %v1091 = vrcp.pop %v1073
      %v1092 = vmul.f32 %v1073, %v1091
      %v1093 = vsub.f32 1.0, %v1092
      %v1094 = vmul.f32 %v1091, %v1093
      %v1095 = vadd.f32 %v1091, %v1094
      %vm1096 = vweird.f32 %v1073
      %vm1097 = vweird.f32 %v1091
      %vm1098 = vmor %vm1096, %vm1097
      %v1099 = vsel %vm1098, %v1091, %v1095
      %v1100 = vand.u32 2147483647, %v1073
      %vm1101 = vcmp.eq.f32.partialorder %v1100, 8.507059e+37
      %v1102 = vand.u32 %v1073, 2147483648
      %v1103 = vor.u32 1.1754944e-38, %v1102
      %v1104 = vsel %vm1101, %v1103, %v1099
      %v1105 = vmul.f32 1.0, %v1104
      %v1106 = vrcp.pop %v1074
      %v1107 = vmul.f32 %v1074, %v1106
      %v1108 = vsub.f32 1.0, %v1107
      %v1109 = vmul.f32 %v1106, %v1108
      %v1110 = vadd.f32 %v1106, %v1109
      %vm1111 = vweird.f32 %v1074
      %vm1112 = vweird.f32 %v1106
      %vm1113 = vmor %vm1111, %vm1112
      %v1114 = vsel %vm1113, %v1106, %v1110
      %v1115 = vand.u32 2147483647, %v1074
      %vm1116 = vcmp.eq.f32.partialorder %v1115, 8.507059e+37
      %v1117 = vand.u32 %v1074, 2147483648
      %v1118 = vor.u32 1.1754944e-38, %v1117
      %v1119 = vsel %vm1116, %v1118, %v1114
      %v1120 = vmul.f32 1.0, %v1119
      %v1121 = vrcp.pop %v1075
      %v1122 = vmul.f32 %v1075, %v1121
      %v1123 = vsub.f32 1.0, %v1122
      %v1124 = vmul.f32 %v1121, %v1123
      %v1125 = vadd.f32 %v1121, %v1124
      %vm1126 = vweird.f32 %v1075
      %vm1127 = vweird.f32 %v1121
      %vm1128 = vmor %vm1126, %vm1127
      %v1129 = vsel %vm1128, %v1121, %v1125
      %v1130 = vand.u32 2147483647, %v1075
      %vm1131 = vcmp.eq.f32.partialorder %v1130, 8.507059e+37
      %v1132 = vand.u32 %v1075, 2147483648
      %v1133 = vor.u32 1.1754944e-38, %v1132
      %v1134 = vsel %vm1131, %v1133, %v1129
      %v1135 = vmul.f32 1.0, %v1134
      %v1136 = vtanh.pop %v883
      %v1137 = vtanh.pop %v885
      %v1138 = vtanh.pop %v888
      %v1139 = vtanh.pop %v890
      %v1140 = vmul.f32 %v1090, %v1136
      %v1141 = vmul.f32 %v1105, %v1137
      %v1142 = vmul.f32 %v1120, %v1138
      %v1143 = vmul.f32 %v1135, %v1139
      %v1144 = vxor.u32 %v873, 2147483648
      %v1145 = vxor.u32 %v875, 2147483648
      %v1146 = vxor.u32 %v878, 2147483648
      %v1147 = vxor.u32 %v880, 2147483648
      %v1148 = vmul.f32 %v1144, 1.442695
      %v1149 = vpow.pop %v1148
      %v1150 = vmul.f32 %v1145, 1.442695
      %v1151 = vpow.pop %v1150
      %v1152 = vmul.f32 %v1146, 1.442695
      %v1153 = vpow.pop %v1152
      %v1154 = vmul.f32 %v1147, 1.442695
      %v1155 = vpow.pop %v1154
      %v1156 = vadd.f32 %v1149, 1.0
      %v1157 = vadd.f32 %v1151, 1.0
      %v1158 = vadd.f32 %v1153, 1.0
      %v1159 = vadd.f32 %v1155, 1.0
      %v1160 = vrcp.pop %v1156
      %v1161 = vmul.f32 %v1156, %v1160
      %v1162 = vsub.f32 1.0, %v1161
      %v1163 = vmul.f32 %v1160, %v1162
      %v1164 = vadd.f32 %v1160, %v1163
      %vm1165 = vweird.f32 %v1156
      %vm1166 = vweird.f32 %v1160
      %vm1167 = vmor %vm1165, %vm1166
      %v1168 = vsel %vm1167, %v1160, %v1164
      %v1169 = vand.u32 2147483647, %v1156
      %vm1170 = vcmp.eq.f32.partialorder %v1169, 8.507059e+37
      %v1171 = vand.u32 %v1156, 2147483648
      %v1172 = vor.u32 1.1754944e-38, %v1171
      %v1173 = vsel %vm1170, %v1172, %v1168
      %v1174 = vmul.f32 1.0, %v1173
      %v1175 = vrcp.pop %v1157
      %v1176 = vmul.f32 %v1157, %v1175
      %v1177 = vsub.f32 1.0, %v1176
      %v1178 = vmul.f32 %v1175, %v1177
      %v1179 = vadd.f32 %v1175, %v1178
      %vm1180 = vweird.f32 %v1157
      %vm1181 = vweird.f32 %v1175
      %vm1182 = vmor %vm1180, %vm1181
      %v1183 = vsel %vm1182, %v1175, %v1179
      %v1184 = vand.u32 2147483647, %v1157
      %vm1185 = vcmp.eq.f32.partialorder %v1184, 8.507059e+37
      %v1186 = vand.u32 %v1157, 2147483648
      %v1187 = vor.u32 1.1754944e-38, %v1186
      %v1188 = vsel %vm1185, %v1187, %v1183
      %v1189 = vmul.f32 1.0, %v1188
      %v1190 = vrcp.pop %v1158
      %v1191 = vmul.f32 %v1158, %v1190
      %v1192 = vsub.f32 1.0, %v1191
      %v1193 = vmul.f32 %v1190, %v1192
      %v1194 = vadd.f32 %v1190, %v1193
      %vm1195 = vweird.f32 %v1158
      %vm1196 = vweird.f32 %v1190
      %vm1197 = vmor %vm1195, %vm1196
      %v1198 = vsel %vm1197, %v1190, %v1194
      %v1199 = vand.u32 2147483647, %v1158
      %vm1200 = vcmp.eq.f32.partialorder %v1199, 8.507059e+37
      %v1201 = vand.u32 %v1158, 2147483648
      %v1202 = vor.u32 1.1754944e-38, %v1201
      %v1203 = vsel %vm1200, %v1202, %v1198
      %v1204 = vmul.f32 1.0, %v1203
      %v1205 = vrcp.pop %v1159
      %v1206 = vmul.f32 %v1159, %v1205
      %v1207 = vsub.f32 1.0, %v1206
      %v1208 = vmul.f32 %v1205, %v1207
      %v1209 = vadd.f32 %v1205, %v1208
      %vm1210 = vweird.f32 %v1159
      %vm1211 = vweird.f32 %v1205
      %vm1212 = vmor %vm1210, %vm1211
      %v1213 = vsel %vm1212, %v1205, %v1209
      %v1214 = vand.u32 2147483647, %v1159
      %vm1215 = vcmp.eq.f32.partialorder %v1214, 8.507059e+37
      %v1216 = vand.u32 %v1159, 2147483648
      %v1217 = vor.u32 1.1754944e-38, %v1216
      %v1218 = vsel %vm1215, %v1217, %v1213
      %v1219 = vmul.f32 1.0, %v1218
      %v1220 = vtanh.pop %v1140
      %v1221 = vtanh.pop %v1141
      %v1222 = vtanh.pop %v1142
      %v1223 = vtanh.pop %v1143
      %v1224 = vmul.f32 %v1174, %v1220
      %v1225 = vmul.f32 %v1189, %v1221
      %v1226 = vmul.f32 %v1204, %v1222
      %v1227 = vmul.f32 %v1219, %v1223
      %v1228 = vsub.f32 0.0, %v1224
      %v1229 = vsub.f32 0.0, %v1225
      %v1230 = vsub.f32 0.0, %v1226
      %v1231 = vsub.f32 0.0, %v1227
      %v1232 = vmul.f32 %v1228, 1.442695
      %v1233 = vpow.pop %v1232
      %v1234 = vmul.f32 %v1229, 1.442695
      %v1235 = vpow.pop %v1234
      %v1236 = vmul.f32 %v1230, 1.442695
      %v1237 = vpow.pop %v1236
      %v1238 = vmul.f32 %v1231, 1.442695
      %v1239 = vpow.pop %v1238
      %v1240 = vadd.f32 %v1233, 1.0
      %v1241 = vadd.f32 %v1235, 1.0
      %v1242 = vadd.f32 %v1237, 1.0
      %v1243 = vadd.f32 %v1239, 1.0
      %v1244 = vrsqrt.pop %v1240
      %v1245 = vmul.f32 %v1244, %v1240
      %v1246 = vmul.f32 %v1245, %v1244
      %v1247 = vmul.f32 0.5, %v1246
      %v1248 = vsub.f32 1.5, %v1247
      %v1249 = vmul.f32 %v1244, %v1248
      %v1250 = vmul.f32 %v1240, %v1249
      %vm1251 = vcmp.eq.f32.partialorder %v1240, inf
      %v1252 = vsel %vm1251, %v1240, %v1250
      %vm1253 = vcmp.eq.f32.partialorder %v1240, 0.0
      %v1254 = vand.u32 %v1240, 2147483648
      %v1255 = vsel %vm1253, %v1254, %v1252
      %v1256 = vrsqrt.pop %v1241
      %v1257 = vmul.f32 %v1256, %v1241
      %v1258 = vmul.f32 %v1257, %v1256
      %v1259 = vmul.f32 0.5, %v1258
      %v1260 = vsub.f32 1.5, %v1259
      %v1261 = vmul.f32 %v1256, %v1260
      %v1262 = vmul.f32 %v1241, %v1261
      %vm1263 = vcmp.eq.f32.partialorder %v1241, inf
      %v1264 = vsel %vm1263, %v1241, %v1262
      %vm1265 = vcmp.eq.f32.partialorder %v1241, 0.0
      %v1266 = vand.u32 %v1241, 2147483648
      %v1267 = vsel %vm1265, %v1266, %v1264
      %v1268 = vrsqrt.pop %v1242
      %v1269 = vmul.f32 %v1268, %v1242
      %v1270 = vmul.f32 %v1269, %v1268
      %v1271 = vmul.f32 0.5, %v1270
      %v1272 = vsub.f32 1.5, %v1271
      %v1273 = vmul.f32 %v1268, %v1272
      %v1274 = vmul.f32 %v1242, %v1273
      %vm1275 = vcmp.eq.f32.partialorder %v1242, inf
      %v1276 = vsel %vm1275, %v1242, %v1274
      %vm1277 = vcmp.eq.f32.partialorder %v1242, 0.0
      %v1278 = vand.u32 %v1242, 2147483648
      %v1279 = vsel %vm1277, %v1278, %v1276
      %v1280 = vrsqrt.pop %v1243
      %v1281 = vmul.f32 %v1280, %v1243
      %v1282 = vmul.f32 %v1281, %v1280
      %v1283 = vmul.f32 0.5, %v1282
      %v1284 = vsub.f32 1.5, %v1283
      %v1285 = vmul.f32 %v1280, %v1284
      %v1286 = vmul.f32 %v1243, %v1285
      %vm1287 = vcmp.eq.f32.partialorder %v1243, inf
      %v1288 = vsel %vm1287, %v1243, %v1286
      %vm1289 = vcmp.eq.f32.partialorder %v1243, 0.0
      %v1290 = vand.u32 %v1243, 2147483648
      %v1291 = vsel %vm1289, %v1290, %v1288
      %v1292 = vmul.f32 %v1056, %v1255
      %v1293 = vmul.f32 %v1057, %v1267
      %v1294 = vmul.f32 %v1058, %v1279
      %v1295 = vmul.f32 %v1059, %v1291
      %1296 = vrot.lane.b32.xlu0 %v374, 1
      %v1297 = vpop.permute.xlu0 %1296
      %1298 = vrot.lane.b32.xlu0 %v376, 1
      %v1299 = vpop.permute.xlu0 %1298
      %1300 = vrot.lane.b32.xlu0 %v379, 1
      %v1301 = vpop.permute.xlu0 %1300
      %1302 = vrot.lane.b32.xlu0 %v381, 1
      %v1303 = vpop.permute.xlu0 %1302
      %v1304 = vsel %vm258, 0.0, %v1297
      %v1305 = vsel %vm258, 0.0, %v1299
      %v1306 = vsel %vm258, 0.0, %v1301
      %v1307 = vsel %vm258, 0.0, %v1303
      %1308 = vrot.lane.b32.xlu0 %v374, 127
      %v1309 = vpop.permute.xlu0 %1308
      %1310 = vrot.lane.b32.xlu0 %v376, 127
      %v1311 = vpop.permute.xlu0 %1310
      %1312 = vrot.lane.b32.xlu0 %v379, 127
      %v1313 = vpop.permute.xlu0 %1312
      %1314 = vrot.lane.b32.xlu0 %v381, 127
      %v1315 = vpop.permute.xlu0 %1314
      %v1316 = vsel %vm259, 0.0, %v1309
      %v1317 = vsel %vm259, 0.0, %v1311
      %v1318 = vsel %vm259, 0.0, %v1313
      %v1319 = vsel %vm259, 0.0, %v1315
      %1320 = vrot.lane.b32.xlu0 %v1292, 1
      %v1321 = vpop.permute.xlu0 %1320
      %1322 = vrot.lane.b32.xlu0 %v1293, 1
      %v1323 = vpop.permute.xlu0 %1322
      %1324 = vrot.lane.b32.xlu0 %v1294, 1
      %v1325 = vpop.permute.xlu0 %1324
      %1326 = vrot.lane.b32.xlu0 %v1295, 1
      %v1327 = vpop.permute.xlu0 %1326
      %v1328 = vsel %vm258, 0.0, %v1321
      %v1329 = vsel %vm258, 0.0, %v1323
      %v1330 = vsel %vm258, 0.0, %v1325
      %v1331 = vsel %vm258, 0.0, %v1327
      %1332 = vrot.lane.b32.xlu0 %v1292, 127
      %v1333 = vpop.permute.xlu0 %1332
      %1334 = vrot.lane.b32.xlu0 %v1293, 127
      %v1335 = vpop.permute.xlu0 %1334
      %1336 = vrot.lane.b32.xlu0 %v1294, 127
      %v1337 = vpop.permute.xlu0 %1336
      %1338 = vrot.lane.b32.xlu0 %v1295, 127
      %v1339 = vpop.permute.xlu0 %1338
      %v1340 = vsel %vm259, 0.0, %v1333
      %v1341 = vsel %vm259, 0.0, %v1335
      %v1342 = vsel %vm259, 0.0, %v1337
      %v1343 = vsel %vm259, 0.0, %v1339
      %v1344 = vld [vmem:[%s3 + $0x100] sm:$0xff]
      %v1345 = vld [vmem:[%s3 + $0x108] sm:$0xff]
      %v1346 = vld [vmem:[%s4 + $0x100] sm:$0xff]
      %v1347 = vld [vmem:[%s4 + $0x108] sm:$0xff]
      %v1348 = vpack.c.bf16 %v1305, %v1304
      %v1349 = vpack.c.bf16 %v1307, %v1306
      %v1350 = vpack.c.bf16 %v376, %v374
      %v1351 = vpack.c.bf16 %v381, %v379
      %v1352 = vpack.c.bf16 %v1317, %v1316
      %v1353 = vpack.c.bf16 %v1319, %v1318
      %v1354 = vpack.c.bf16 %v1329, %v1328
      %v1355 = vpack.c.bf16 %v1331, %v1330
      %v1356 = vpack.c.bf16 %v1293, %v1292
      %v1357 = vpack.c.bf16 %v1295, %v1294
      %v1358 = vpack.c.bf16 %v1341, %v1340
      %v1359 = vpack.c.bf16 %v1343, %v1342
      %1361 = vset.pattern.permute.xlu0 0
      %1362 = vperm.xlu0 %1361, %v1346
      %v1363 = vpop.permute.xlu0 %1362
      %1366 = vset.pattern.permute.xlu0 0
      %1367 = vperm.xlu0 %1366, %v1347
      %v1368 = vpop.permute.xlu0 %1367
      %v1372 = vunpack.c.l.b16 %v1344
      %v1373 = vunpack.c.h.b16 %v1344
      %v1374 = vunpack.c.l.b16 %v1345
      %v1375 = vunpack.c.h.b16 %v1345
      %v1376 = vpack.c.b16 %v1374, %v1372
      %v1377 = vpack.c.b16 %v1375, %v1373
      %v1380 = vsel %vm717, %v1377, 0
      %1382 = vmatpush.bf16.msra.mxu0 %v1355
      %1383 = vmatpush.bf16.msra.mxu0 %v1354
      %1384 = vmatpush.bf16.msra.mxu0 %v1353
      %1385 = vmatpush.bf16.msra.mxu0 %v1352
      %1386 = vmatpush.bf16.msra.mxu0 %v1351
      %1387 = vmatpush.bf16.msra.mxu0 %v1350
      %1388 = vmatpush.bf16.msra.mxu0 %v1349
      %1389 = vmatpush.bf16.msra.mxu0 %v1348
      %1390 = vmatmul.bf16.gmra.mxu0 %v1376
      %v1391 = vpop.f32.mrf.mxu0
      %v1392 = vadd.f32 %v1363, %v1391
      %v1393 = vpop.f32.mrf.mxu0
      %v1394 = vadd.f32 %v1368, %v1393
      %1395 = vdwg.mxu0
      %1396 = vmatpush.bf16.msra.mxu0 0
      %1397 = vmatpush.bf16.msra.mxu0 0
      %1398 = vmatpush.bf16.msra.mxu0 0
      %1399 = vmatpush.bf16.msra.mxu0 0
      %1400 = vmatpush.bf16.msra.mxu0 %v1359
      %1401 = vmatpush.bf16.msra.mxu0 %v1358
      %1402 = vmatpush.bf16.msra.mxu0 %v1357
      %1403 = vmatpush.bf16.msra.mxu0 %v1356
      %1404 = vmatmul.bf16.gmra.mxu0 %v1380
      %v1405 = vpop.f32.mrf.mxu0
      %v1406 = vadd.f32 %v1392, %v1405
      %v1407 = vpop.f32.mrf.mxu0
      %v1408 = vadd.f32 %v1394, %v1407
      %1409 = vdwg.mxu0
      %v1410 = vmul.f32 %v1406, %v1408
      %1411 = vst [vmem:[%s237] sm:$0xff] %v1410
      %p1412 = scmp.lt.s32.totalorder %s17, 1
      %s1413 = scalar_select %p1412, %s17, 1
      %s1414 = smul.addr %s1413, 8
      %s1415 = scalar_lea.vmem %s5, %s1414
      // Predicated region
      $region41: #{rearranged_conv_lstm_grad_forward.1} parent=39 // pred_check
        %p1416 = pneg %p150
      $region42: #{rearranged_conv_lstm_grad_forward.1} parent=39 // pred_check_branch
        %1418 = sbr.rel (%p1416) target = $region44
      $region43: #{rearranged_conv_lstm_grad_forward.1} parent=39 // pred_region
        _
      $region44: #{rearranged_conv_lstm_grad_forward.1} parent=39 // pred_fallthru
        _
    $region40: #{rearranged_conv_lstm_grad_forward.1} parent=5 // pred_fallthru
      _
    %p1419 = scmp.le.s32.totalorder 2, %s12
    // Predicated region
    $region45: #{rearranged_conv_lstm_grad_forward.1} parent=5 // pred_check
      %p1420 = pneg %p1419
    $region46: #{rearranged_conv_lstm_grad_forward.1} parent=5 // pred_check_branch
      %1422 = sbr.rel (%p1420) target = $region48
    $region47: #{rearranged_conv_lstm_grad_forward.1} parent=5 // pred_region
      %s1423 = ssub.s32 %s12, 2
      // Predicated region
      $region49: #{rearranged_conv_lstm_grad_forward.1} parent=47 // pred_check
        %p1424 = pneg %p156
      $region50: #{rearranged_conv_lstm_grad_forward.1} parent=47 // pred_check_branch
        %1426 = sbr.rel (%p1424) target = $region52
      $region51: #{rearranged_conv_lstm_grad_forward.1} parent=47 // pred_region
        %p1427 = scmp.lt.s32.totalorder %s18, 1
        %s1428 = scalar_select %p1427, %s18, 1
        %s1429 = smul.addr %s1428, 8
        %s1430 = scalar_lea.vmem %s5, %s1429
      $region52: #{rearranged_conv_lstm_grad_forward.1} parent=47 // pred_fallthru
        _
    $region48: #{rearranged_conv_lstm_grad_forward.1} parent=5 // pred_fallthru
      _
  $region6: #{rearranged_conv_lstm_grad_forward.1} parent=0 // loop_footer
    %s16 = sadd.s32 1, %s12
  $region7: #{rearranged_conv_lstm_grad_forward.1} parent=0 // loop_footer_branch
    %11 = sbr.rel target = $region3
  $region8: #{rearranged_conv_lstm_grad_forward.1} parent=0 // loop_exit
    _

</llo_original>
